<compile_context>
chip_gen: v5e
topology: v5e:2x2
jax: 0.10.0
libtpu: 0.0.40
codegen_flags: <defaults>
</compile_context>

<pallas_src>
import math
import functools

import jax
import jax.numpy as jnp
import numpy as np
from jax.experimental import pallas as pl
from jax.experimental.pallas import tpu as pltpu


def _mha_kernel(q_ref, k_ref, v_ref, bias_ref,
                wq_ref, bq_ref, wk_ref, bk_ref,
                wv_ref, bv_ref, wo_ref, bo_ref,
                o_ref,
                kp_ref, vp_ref, attn_ref,
                *, num_heads: int, d_k: int):
    qi = pl.program_id(1)

    # --- Project K and V once per batch (q-tile axis iterates innermost and
    # sequentially); cache in bf16 VMEM scratch, reused for every q tile. ---
    @pl.when(qi == 0)
    def _():
        k_in = k_ref[0].astype(jnp.bfloat16)                       # (S, D)
        v_in = v_ref[0].astype(jnp.bfloat16)                       # (S, D)
        kp_ref[...] = (jnp.dot(k_in, wk_ref[...],
                               preferred_element_type=jnp.float32)
                       + bk_ref[...]).astype(jnp.bfloat16)
        vp_ref[...] = (jnp.dot(v_in, wv_ref[...],
                               preferred_element_type=jnp.float32)
                       + bv_ref[...]).astype(jnp.bfloat16)

    # --- Q projection for this query tile (1/sqrt(d_k) pre-folded into wq/bq).
    q_in = q_ref[0].astype(jnp.bfloat16)                           # (Tq, D)
    qp = (jnp.dot(q_in, wq_ref[...], preferred_element_type=jnp.float32)
          + bq_ref[...]).astype(jnp.bfloat16)                      # (Tq, D)

    neg_bias = bias_ref[0]                                         # (1, S) f32
    kp = kp_ref[...]                                               # (S, D) bf16
    vp = vp_ref[...]                                               # (S, D) bf16

    # Per-head attention; head h owns column block [h*d_k, (h+1)*d_k).
    for h in range(num_heads):
        sl = slice(h * d_k, (h + 1) * d_k)
        qh = qp[:, sl]                                             # (Tq, d_k)
        kh = kp[:, sl]                                             # (S,  d_k)
        vh = vp[:, sl]                                             # (S,  d_k)

        # QK^T: contract on d_k directly, no kh.T materialization.
        scores = jax.lax.dot_general(
            qh, kh, dimension_numbers=(((1,), (1,)), ((), ())),
            preferred_element_type=jnp.float32)                    # (Tq, S)
        scores = scores + neg_bias                                 # mask bias

        # Numerically stable softmax; denominator folded into the output.
        m = jnp.max(scores, axis=-1, keepdims=True)                # (Tq, 1)
        e = jnp.exp(scores - m)                                    # (Tq, S)
        denom = jnp.sum(e, axis=-1, keepdims=True)                 # (Tq, 1)

        ctx = jnp.dot(e.astype(jnp.bfloat16), vh,
                      preferred_element_type=jnp.float32)          # (Tq, d_k)
        ctx = ctx * pl.reciprocal(denom, approx=True)

        # combine_heads: write this head's slice straight into VMEM scratch.
        attn_ref[:, sl] = ctx.astype(jnp.bfloat16)

    # Output projection from the combined-heads scratch.
    out = (jnp.dot(attn_ref[...], wo_ref[...],
                   preferred_element_type=jnp.float32) + bo_ref[...])
    o_ref[0] = out.astype(o_ref.dtype)


def _choose_q_tile(S):
    """Largest convenient q-tile: 256/128 if they divide S, else full S."""
    for t in (256, 128):
        if S % t == 0:
            return t
    return S


def multi_head_attention(q, k, v, params, mask=None, *, num_heads: int):
    """q, k, v: (B, S, d_model) float32. mask: optional (B, 1, S)."""
    B, S, D = q.shape
    assert D % num_heads == 0
    d_k = D // num_heads

    # Mask -> additive bias, computed once in the wrapper.
    if mask is None:
        neg_bias = jnp.zeros((B, 1, S), jnp.float32)
    else:
        neg_bias = jnp.where(mask == 0, jnp.float32(-1000000000.0),
                             jnp.float32(0.0)).astype(jnp.float32)

    # Pre-transpose weights (kernel computes x @ W^T + b), cast to bf16 for
    # MXU throughput, and fold the 1/sqrt(d_k) scale into the Q projection.
    scale = 1.0 / math.sqrt(d_k)
    wq = (params["w_q"]["weight"].T * scale).astype(jnp.bfloat16)
    wk = params["w_k"]["weight"].T.astype(jnp.bfloat16)
    wv = params["w_v"]["weight"].T.astype(jnp.bfloat16)
    wo = params["w_o"]["weight"].T.astype(jnp.bfloat16)
    bq = (params["w_q"]["bias"] * scale).reshape(1, D).astype(jnp.float32)
    bk = params["w_k"]["bias"].reshape(1, D).astype(jnp.float32)
    bv = params["w_v"]["bias"].reshape(1, D).astype(jnp.float32)
    bo = params["w_o"]["bias"].reshape(1, D).astype(jnp.float32)

    tq = _choose_q_tile(S)
    n_q = S // tq

    q_spec = pl.BlockSpec((1, tq, D), lambda b, qi: (b, qi, 0))
    kv_spec = pl.BlockSpec((1, S, D), lambda b, qi: (b, 0, 0))
    bias_spec = pl.BlockSpec((1, 1, S), lambda b, qi: (b, 0, 0))
    # Weights/biases are grid-invariant (constant index map -> no re-DMA).
    w_spec = pl.BlockSpec((D, D), lambda b, qi: (0, 0))
    b_spec = pl.BlockSpec((1, D), lambda b, qi: (0, 0))

    kernel = functools.partial(_mha_kernel, num_heads=num_heads, d_k=d_k)

    # Advisory cost estimate for XLA's scheduler.
    flops = B * (8 * S * D * D + 4 * S * S * D)
    transcendentals = B * num_heads * S * S
    bytes_accessed = (4 * (4 * B * S * D + B * S)      # q,k,v,out f32 + bias
                      + 2 * 4 * D * D + 4 * 4 * D)     # bf16 weights + biases

    return pl.pallas_call(
        kernel,
        out_shape=jax.ShapeDtypeStruct((B, S, D), q.dtype),
        grid_spec=pltpu.PrefetchScalarGridSpec(
            num_scalar_prefetch=0,
            grid=(B, n_q),
            in_specs=[q_spec, kv_spec, kv_spec, bias_spec,
                      w_spec, b_spec, w_spec, b_spec,
                      w_spec, b_spec, w_spec, b_spec],
            out_specs=q_spec,
            scratch_shapes=[
                pltpu.VMEM((S, D), jnp.bfloat16),    # projected K (per batch)
                pltpu.VMEM((S, D), jnp.bfloat16),    # projected V (per batch)
                pltpu.VMEM((tq, D), jnp.bfloat16),   # combined-heads output
            ]),
        compiler_params=pltpu.CompilerParams(
            # batch axis is megacore-parallel; q-tile axis carries the K/V
            # projection cache in scratch, so it stays "arbitrary".
            dimension_semantics=("parallel", "arbitrary")),
        cost_estimate=pl.CostEstimate(
            flops=flops, transcendentals=transcendentals,
            bytes_accessed=bytes_accessed),
    )(q, k, v, neg_bias, wq, bq, wk, bk, wv, bv, wo, bo)


def _init_params(key, d_model):
    """Deterministic nn.Linear-style init: weight (out, in), bias (out,)."""
    params = {}
    bound = 1.0 / math.sqrt(d_model)
    for name in ("w_q", "w_k", "w_v", "w_o"):
        key, k1, k2 = jax.random.split(key, 3)
        params[name] = {
            "weight": jax.random.uniform(k1, (d_model, d_model), jnp.float32,
                                         -bound, bound),
            "bias": jax.random.uniform(k2, (d_model,), jnp.float32,
                                       -bound, bound),
        }
    return params


def _reference(q, k, v, params, mask, num_heads):
    """Pure-JAX f32 reference mirroring the PyTorch module."""
    B, S, D = q.shape
    d_k = D // num_heads

    def linear(x, p):
        return x @ p["weight"].T + p["bias"]

    def split(x):
        return x.reshape(B, S, num_heads, d_k).transpose(0, 2, 1, 3)

    qh = split(linear(q, params["w_q"]))
    kh = split(linear(k, params["w_k"]))
    vh = split(linear(v, params["w_v"]))

    scores = jnp.einsum("bhqd,bhkd->bhqk", qh, kh) / math.sqrt(d_k)
    if mask is not None:
        scores = jnp.where(mask[:, None, :, :] == 0, -1000000000.0, scores)
    probs = jax.nn.softmax(scores, axis=-1)
    attn = jnp.einsum("bhqk,bhkd->bhqd", probs, vh)
    attn = attn.transpose(0, 2, 1, 3).reshape(B, S, D)
    return linear(attn, params["w_o"])


if __name__ == "__main__":
    B, S, d_model, num_heads = 2, 8, 32, 4

    key = jax.random.PRNGKey(0)
    key, kq, kk, kv, km, kp = jax.random.split(key, 6)
    q = jax.random.normal(kq, (B, S, d_model), jnp.float32)
    k = jax.random.normal(kk, (B, S, d_model), jnp.float32)
    v = jax.random.normal(kv, (B, S, d_model), jnp.float32)
    # Padding-style mask (B, 1, S): 1 = keep, 0 = mask out.  Force at least one
    # unmasked key per batch so additive-bias masking == masked_fill exactly.
    mask = (jax.random.uniform(km, (B, 1, S)) > 0.2).astype(jnp.float32)
    mask = mask.at[:, :, 0].set(1.0)

    params = _init_params(kp, d_model)

    out = multi_head_attention(q, k, v, params, mask=mask, num_heads=num_heads)
    out = jax.block_until_ready(out)

    ref = _reference(q, k, v, params, mask, num_heads)
    # bf16 matmul operands (f32 accumulation) => ~1% level differences vs the
    # pure-f32 reference; softmax itself is computed in f32.
    np.testing.assert_allclose(np.asarray(out), np.asarray(ref),
                               rtol=5e-2, atol=5e-2)

    print("KERNEL_OK")
</pallas_src>

<mosaic_0001>
module attributes {stable_mosaic.version = 11 : i64} {
  func.func @_mha_kernel(%arg0: i32, %arg1: i32, %arg2: memref<1x8x32xf32, #tpu.memory_space<vmem>>, %arg3: memref<1x8x32xf32, #tpu.memory_space<vmem>>, %arg4: memref<1x8x32xf32, #tpu.memory_space<vmem>>, %arg5: memref<1x1x8xf32, #tpu.memory_space<vmem>>, %arg6: memref<32x32xbf16, #tpu.memory_space<vmem>>, %arg7: memref<1x32xf32, #tpu.memory_space<vmem>>, %arg8: memref<32x32xbf16, #tpu.memory_space<vmem>>, %arg9: memref<1x32xf32, #tpu.memory_space<vmem>>, %arg10: memref<32x32xbf16, #tpu.memory_space<vmem>>, %arg11: memref<1x32xf32, #tpu.memory_space<vmem>>, %arg12: memref<32x32xbf16, #tpu.memory_space<vmem>>, %arg13: memref<1x32xf32, #tpu.memory_space<vmem>>, %arg14: memref<1x8x32xf32, #tpu.memory_space<vmem>>, %arg15: memref<8x32xbf16, #tpu.memory_space<vmem>>, %arg16: memref<8x32xbf16, #tpu.memory_space<vmem>>, %arg17: memref<8x32xbf16, #tpu.memory_space<vmem>>) attributes {dimension_semantics = [#tpu.dimension_semantics<parallel>, #tpu.dimension_semantics<arbitrary>], iteration_bounds = array<i64: 2, 1>, scalar_prefetch = 0 : i64, scratch_operands = 3 : i64, tpu.core_type = #tpu.core_type<tc>, window_params = [{transform_indices = @transform_0, window_bounds = array<i64: 1, 8, 32>}, {transform_indices = @transform_1, window_bounds = array<i64: 1, 8, 32>}, {transform_indices = @transform_2, window_bounds = array<i64: 1, 8, 32>}, {transform_indices = @transform_3, window_bounds = array<i64: 1, 1, 8>}, {pipeline_mode = #tpu.pipeline_mode<synchronous>, transform_indices = @transform_4, window_bounds = array<i64: 32, 32>}, {pipeline_mode = #tpu.pipeline_mode<synchronous>, transform_indices = @transform_5, window_bounds = array<i64: 1, 32>}, {pipeline_mode = #tpu.pipeline_mode<synchronous>, transform_indices = @transform_6, window_bounds = array<i64: 32, 32>}, {pipeline_mode = #tpu.pipeline_mode<synchronous>, transform_indices = @transform_7, window_bounds = array<i64: 1, 32>}, {pipeline_mode = #tpu.pipeline_mode<synchronous>, transform_indices = @transform_8, window_bounds = array<i64: 32, 32>}, {pipeline_mode = #tpu.pipeline_mode<synchronous>, transform_indices = @transform_9, window_bounds = array<i64: 1, 32>}, {pipeline_mode = #tpu.pipeline_mode<synchronous>, transform_indices = @transform_10, window_bounds = array<i64: 32, 32>}, {pipeline_mode = #tpu.pipeline_mode<synchronous>, transform_indices = @transform_11, window_bounds = array<i64: 1, 32>}, {transform_indices = @transform_12, window_bounds = array<i64: 1, 8, 32>}]} {
    %c0_i32 = arith.constant 0 : i32
    %0 = arith.cmpi eq, %arg1, %c0_i32 : i32
    %1 = arith.extui %0 : i1 to i32
    %c0_i32_0 = arith.constant 0 : i32
    %2 = arith.cmpi ne, %1, %c0_i32_0 : i32
    scf.if %2 {
      %c0_45 = arith.constant 0 : index
      %c0_46 = arith.constant 0 : index
      %c0_47 = arith.constant 0 : index
      %105 = vector.load %arg3[%c0_45, %c0_46, %c0_47] : memref<1x8x32xf32, #tpu.memory_space<vmem>>, vector<1x8x32xf32>
      %106 = vector.shape_cast %105 : vector<1x8x32xf32> to vector<8x32xf32>
      %107 = arith.truncf %106 : vector<8x32xf32> to vector<8x32xbf16>
      %c0_48 = arith.constant 0 : index
      %c0_49 = arith.constant 0 : index
      %c0_50 = arith.constant 0 : index
      %108 = vector.load %arg4[%c0_48, %c0_49, %c0_50] : memref<1x8x32xf32, #tpu.memory_space<vmem>>, vector<1x8x32xf32>
      %109 = vector.shape_cast %108 : vector<1x8x32xf32> to vector<8x32xf32>
      %110 = arith.truncf %109 : vector<8x32xf32> to vector<8x32xbf16>
      %c0_51 = arith.constant 0 : index
      %c0_52 = arith.constant 0 : index
      %111 = vector.load %arg8[%c0_51, %c0_52] : memref<32x32xbf16, #tpu.memory_space<vmem>>, vector<32x32xbf16>
      %cst_53 = arith.constant dense<0.000000e+00> : vector<8x32xf32>
      %112 = tpu.matmul %107, %111, %cst_53 {dimension_numbers = #tpu.dot_dimension_numbers<[1], [0], [0], [1], [0, 0, 1, 1], [], []>} : vector<8x32xbf16>, vector<32x32xbf16>, vector<8x32xf32> -> vector<8x32xf32>
      %c0_54 = arith.constant 0 : index
      %c0_55 = arith.constant 0 : index
      %113 = vector.load %arg9[%c0_54, %c0_55] : memref<1x32xf32, #tpu.memory_space<vmem>>, vector<1x32xf32>
      %114 = vector.broadcast %113 : vector<1x32xf32> to vector<8x32xf32>
      %115 = arith.addf %112, %114 : vector<8x32xf32>
      %116 = arith.truncf %115 : vector<8x32xf32> to vector<8x32xbf16>
      %c0_56 = arith.constant 0 : index
      %c0_57 = arith.constant 0 : index
      %117 = vector.load %arg15[%c0_56, %c0_57] : memref<8x32xbf16, #tpu.memory_space<vmem>>, vector<8x32xbf16>
      tpu.vector_store %arg15[%c0_56, %c0_57], %116 {strides = array<i32>} : memref<8x32xbf16, #tpu.memory_space<vmem>>, vector<8x32xbf16>,
      %c0_58 = arith.constant 0 : index
      %c0_59 = arith.constant 0 : index
      %118 = vector.load %arg10[%c0_58, %c0_59] : memref<32x32xbf16, #tpu.memory_space<vmem>>, vector<32x32xbf16>
      %cst_60 = arith.constant dense<0.000000e+00> : vector<8x32xf32>
      %119 = tpu.matmul %110, %118, %cst_60 {dimension_numbers = #tpu.dot_dimension_numbers<[1], [0], [0], [1], [0, 0, 1, 1], [], []>} : vector<8x32xbf16>, vector<32x32xbf16>, vector<8x32xf32> -> vector<8x32xf32>
      %c0_61 = arith.constant 0 : index
      %c0_62 = arith.constant 0 : index
      %120 = vector.load %arg11[%c0_61, %c0_62] : memref<1x32xf32, #tpu.memory_space<vmem>>, vector<1x32xf32>
      %121 = vector.broadcast %120 : vector<1x32xf32> to vector<8x32xf32>
      %122 = arith.addf %119, %121 : vector<8x32xf32>
      %123 = arith.truncf %122 : vector<8x32xf32> to vector<8x32xbf16>
      %c0_63 = arith.constant 0 : index
      %c0_64 = arith.constant 0 : index
      %124 = vector.load %arg16[%c0_63, %c0_64] : memref<8x32xbf16, #tpu.memory_space<vmem>>, vector<8x32xbf16>
      tpu.vector_store %arg16[%c0_63, %c0_64], %123 {strides = array<i32>} : memref<8x32xbf16, #tpu.memory_space<vmem>>, vector<8x32xbf16>,
    } else {
    }
    %c0 = arith.constant 0 : index
    %c0_1 = arith.constant 0 : index
    %c0_2 = arith.constant 0 : index
    %3 = vector.load %arg2[%c0, %c0_1, %c0_2] : memref<1x8x32xf32, #tpu.memory_space<vmem>>, vector<1x8x32xf32>
    %4 = vector.shape_cast %3 : vector<1x8x32xf32> to vector<8x32xf32>
    %5 = arith.truncf %4 : vector<8x32xf32> to vector<8x32xbf16>
    %c0_3 = arith.constant 0 : index
    %c0_4 = arith.constant 0 : index
    %6 = vector.load %arg6[%c0_3, %c0_4] : memref<32x32xbf16, #tpu.memory_space<vmem>>, vector<32x32xbf16>
    %cst = arith.constant dense<0.000000e+00> : vector<8x32xf32>
    %7 = tpu.matmul %5, %6, %cst {dimension_numbers = #tpu.dot_dimension_numbers<[1], [0], [0], [1], [0, 0, 1, 1], [], []>} : vector<8x32xbf16>, vector<32x32xbf16>, vector<8x32xf32> -> vector<8x32xf32>
    %c0_5 = arith.constant 0 : index
    %c0_6 = arith.constant 0 : index
    %8 = vector.load %arg7[%c0_5, %c0_6] : memref<1x32xf32, #tpu.memory_space<vmem>>, vector<1x32xf32>
    %9 = vector.broadcast %8 : vector<1x32xf32> to vector<8x32xf32>
    %10 = arith.addf %7, %9 : vector<8x32xf32>
    %11 = arith.truncf %10 : vector<8x32xf32> to vector<8x32xbf16>
    %c0_7 = arith.constant 0 : index
    %c0_8 = arith.constant 0 : index
    %c0_9 = arith.constant 0 : index
    %12 = vector.load %arg5[%c0_7, %c0_8, %c0_9] : memref<1x1x8xf32, #tpu.memory_space<vmem>>, vector<1x1x8xf32>
    %13 = vector.shape_cast %12 : vector<1x1x8xf32> to vector<1x8xf32>
    %c0_10 = arith.constant 0 : index
    %c0_11 = arith.constant 0 : index
    %14 = vector.load %arg15[%c0_10, %c0_11] : memref<8x32xbf16, #tpu.memory_space<vmem>>, vector<8x32xbf16>
    %c0_12 = arith.constant 0 : index
    %c0_13 = arith.constant 0 : index
    %15 = vector.load %arg16[%c0_12, %c0_13] : memref<8x32xbf16, #tpu.memory_space<vmem>>, vector<8x32xbf16>
    %16 = vector.extract_strided_slice %11 {offsets = [0, 0], sizes = [8, 8], strides = [1, 1]} : vector<8x32xbf16> to vector<8x8xbf16>
    %17 = vector.extract_strided_slice %14 {offsets = [0, 0], sizes = [8, 8], strides = [1, 1]} : vector<8x32xbf16> to vector<8x8xbf16>
    %18 = vector.extract_strided_slice %15 {offsets = [0, 0], sizes = [8, 8], strides = [1, 1]} : vector<8x32xbf16> to vector<8x8xbf16>
    %cst_14 = arith.constant dense<0.000000e+00> : vector<8x8xf32>
    %19 = tpu.matmul %16, %17, %cst_14 {dimension_numbers = #tpu.dot_dimension_numbers<[1], [1], [0], [0], [0, 0, 1, 0], [], []>} : vector<8x8xbf16>, vector<8x8xbf16>, vector<8x8xf32> -> vector<8x8xf32>
    %20 = vector.broadcast %13 : vector<1x8xf32> to vector<8x8xf32>
    %21 = arith.addf %19, %20 : vector<8x8xf32>
    %cst_15 = arith.constant dense<0xFF800000> : vector<8xf32>
    %22 = vector.multi_reduction <maximumf>, %21, %cst_15 [1] : vector<8x8xf32> to vector<8xf32>
    %23 = vector.shape_cast %22 : vector<8xf32> to vector<8x1xf32>
    %24 = vector.broadcast %23 : vector<8x1xf32> to vector<8x8xf32>
    %25 = arith.subf %21, %24 : vector<8x8xf32>
    %26 = math.exp %25 : vector<8x8xf32>
    %cst_16 = arith.constant dense<0.000000e+00> : vector<8xf32>
    %27 = vector.multi_reduction <add>, %26, %cst_16 [1] : vector<8x8xf32> to vector<8xf32>
    %28 = vector.shape_cast %27 : vector<8xf32> to vector<8x1xf32>
    %29 = arith.truncf %26 : vector<8x8xf32> to vector<8x8xbf16>
    %cst_17 = arith.constant dense<0.000000e+00> : vector<8x8xf32>
    %30 = tpu.matmul %29, %18, %cst_17 {dimension_numbers = #tpu.dot_dimension_numbers<[1], [0], [0], [1], [0, 0, 1, 1], [], []>} : vector<8x8xbf16>, vector<8x8xbf16>, vector<8x8xf32> -> vector<8x8xf32>
    %31 = tpu.reciprocal %28 {approx = true} : vector<8x1xf32> -> vector<8x1xf32>
    %32 = vector.broadcast %31 : vector<8x1xf32> to vector<8x8xf32>
    %33 = arith.mulf %30, %32 : vector<8x8xf32>
    %34 = arith.truncf %33 : vector<8x8xf32> to vector<8x8xbf16>
    %c0_18 = arith.constant 0 : index
    %c0_19 = arith.constant 0 : index
    %35 = vector.load %arg17[%c0_18, %c0_19] : memref<8x32xbf16, #tpu.memory_space<vmem>>, vector<8x8xbf16>
    tpu.vector_store %arg17[%c0_18, %c0_19], %34 {strides = array<i32>} : memref<8x32xbf16, #tpu.memory_space<vmem>>, vector<8x8xbf16>,
    %36 = vector.extract_strided_slice %11 {offsets = [0, 8], sizes = [8, 8], strides = [1, 1]} : vector<8x32xbf16> to vector<8x8xbf16>
    %37 = vector.extract_strided_slice %14 {offsets = [0, 8], sizes = [8, 8], strides = [1, 1]} : vector<8x32xbf16> to vector<8x8xbf16>
    %38 = vector.extract_strided_slice %15 {offsets = [0, 8], sizes = [8, 8], strides = [1, 1]} : vector<8x32xbf16> to vector<8x8xbf16>
    %cst_20 = arith.constant dense<0.000000e+00> : vector<8x8xf32>
    %39 = tpu.matmul %36, %37, %cst_20 {dimension_numbers = #tpu.dot_dimension_numbers<[1], [1], [0], [0], [0, 0, 1, 0], [], []>} : vector<8x8xbf16>, vector<8x8xbf16>, vector<8x8xf32> -> vector<8x8xf32>
    %40 = vector.broadcast %13 : vector<1x8xf32> to vector<8x8xf32>
    %41 = arith.addf %39, %40 : vector<8x8xf32>
    %cst_21 = arith.constant dense<0xFF800000> : vector<8xf32>
    %42 = vector.multi_reduction <maximumf>, %41, %cst_21 [1] : vector<8x8xf32> to vector<8xf32>
    %43 = vector.shape_cast %42 : vector<8xf32> to vector<8x1xf32>
    %44 = vector.broadcast %43 : vector<8x1xf32> to vector<8x8xf32>
    %45 = arith.subf %41, %44 : vector<8x8xf32>
    %46 = math.exp %45 : vector<8x8xf32>
    %cst_22 = arith.constant dense<0.000000e+00> : vector<8xf32>
    %47 = vector.multi_reduction <add>, %46, %cst_22 [1] : vector<8x8xf32> to vector<8xf32>
    %48 = vector.shape_cast %47 : vector<8xf32> to vector<8x1xf32>
    %49 = arith.truncf %46 : vector<8x8xf32> to vector<8x8xbf16>
    %cst_23 = arith.constant dense<0.000000e+00> : vector<8x8xf32>
    %50 = tpu.matmul %49, %38, %cst_23 {dimension_numbers = #tpu.dot_dimension_numbers<[1], [0], [0], [1], [0, 0, 1, 1], [], []>} : vector<8x8xbf16>, vector<8x8xbf16>, vector<8x8xf32> -> vector<8x8xf32>
    %51 = tpu.reciprocal %48 {approx = true} : vector<8x1xf32> -> vector<8x1xf32>
    %52 = vector.broadcast %51 : vector<8x1xf32> to vector<8x8xf32>
    %53 = arith.mulf %50, %52 : vector<8x8xf32>
    %54 = arith.truncf %53 : vector<8x8xf32> to vector<8x8xbf16>
    %c0_24 = arith.constant 0 : index
    %c8 = arith.constant 8 : index
    %55 = vector.load %arg17[%c0_24, %c8] : memref<8x32xbf16, #tpu.memory_space<vmem>>, vector<8x8xbf16>
    tpu.vector_store %arg17[%c0_24, %c8], %54 {strides = array<i32>} : memref<8x32xbf16, #tpu.memory_space<vmem>>, vector<8x8xbf16>,
    %56 = vector.extract_strided_slice %11 {offsets = [0, 16], sizes = [8, 8], strides = [1, 1]} : vector<8x32xbf16> to vector<8x8xbf16>
    %57 = vector.extract_strided_slice %14 {offsets = [0, 16], sizes = [8, 8], strides = [1, 1]} : vector<8x32xbf16> to vector<8x8xbf16>
    %58 = vector.extract_strided_slice %15 {offsets = [0, 16], sizes = [8, 8], strides = [1, 1]} : vector<8x32xbf16> to vector<8x8xbf16>
    %cst_25 = arith.constant dense<0.000000e+00> : vector<8x8xf32>
    %59 = tpu.matmul %56, %57, %cst_25 {dimension_numbers = #tpu.dot_dimension_numbers<[1], [1], [0], [0], [0, 0, 1, 0], [], []>} : vector<8x8xbf16>, vector<8x8xbf16>, vector<8x8xf32> -> vector<8x8xf32>
    %60 = vector.broadcast %13 : vector<1x8xf32> to vector<8x8xf32>
    %61 = arith.addf %59, %60 : vector<8x8xf32>
    %cst_26 = arith.constant dense<0xFF800000> : vector<8xf32>
    %62 = vector.multi_reduction <maximumf>, %61, %cst_26 [1] : vector<8x8xf32> to vector<8xf32>
    %63 = vector.shape_cast %62 : vector<8xf32> to vector<8x1xf32>
    %64 = vector.broadcast %63 : vector<8x1xf32> to vector<8x8xf32>
    %65 = arith.subf %61, %64 : vector<8x8xf32>
    %66 = math.exp %65 : vector<8x8xf32>
    %cst_27 = arith.constant dense<0.000000e+00> : vector<8xf32>
    %67 = vector.multi_reduction <add>, %66, %cst_27 [1] : vector<8x8xf32> to vector<8xf32>
    %68 = vector.shape_cast %67 : vector<8xf32> to vector<8x1xf32>
    %69 = arith.truncf %66 : vector<8x8xf32> to vector<8x8xbf16>
    %cst_28 = arith.constant dense<0.000000e+00> : vector<8x8xf32>
    %70 = tpu.matmul %69, %58, %cst_28 {dimension_numbers = #tpu.dot_dimension_numbers<[1], [0], [0], [1], [0, 0, 1, 1], [], []>} : vector<8x8xbf16>, vector<8x8xbf16>, vector<8x8xf32> -> vector<8x8xf32>
    %71 = tpu.reciprocal %68 {approx = true} : vector<8x1xf32> -> vector<8x1xf32>
    %72 = vector.broadcast %71 : vector<8x1xf32> to vector<8x8xf32>
    %73 = arith.mulf %70, %72 : vector<8x8xf32>
    %74 = arith.truncf %73 : vector<8x8xf32> to vector<8x8xbf16>
    %c0_29 = arith.constant 0 : index
    %c16 = arith.constant 16 : index
    %75 = vector.load %arg17[%c0_29, %c16] : memref<8x32xbf16, #tpu.memory_space<vmem>>, vector<8x8xbf16>
    tpu.vector_store %arg17[%c0_29, %c16], %74 {strides = array<i32>} : memref<8x32xbf16, #tpu.memory_space<vmem>>, vector<8x8xbf16>,
    %76 = vector.extract_strided_slice %11 {offsets = [0, 24], sizes = [8, 8], strides = [1, 1]} : vector<8x32xbf16> to vector<8x8xbf16>
    %77 = vector.extract_strided_slice %14 {offsets = [0, 24], sizes = [8, 8], strides = [1, 1]} : vector<8x32xbf16> to vector<8x8xbf16>
    %78 = vector.extract_strided_slice %15 {offsets = [0, 24], sizes = [8, 8], strides = [1, 1]} : vector<8x32xbf16> to vector<8x8xbf16>
    %cst_30 = arith.constant dense<0.000000e+00> : vector<8x8xf32>
    %79 = tpu.matmul %76, %77, %cst_30 {dimension_numbers = #tpu.dot_dimension_numbers<[1], [1], [0], [0], [0, 0, 1, 0], [], []>} : vector<8x8xbf16>, vector<8x8xbf16>, vector<8x8xf32> -> vector<8x8xf32>
    %80 = vector.broadcast %13 : vector<1x8xf32> to vector<8x8xf32>
    %81 = arith.addf %79, %80 : vector<8x8xf32>
    %cst_31 = arith.constant dense<0xFF800000> : vector<8xf32>
    %82 = vector.multi_reduction <maximumf>, %81, %cst_31 [1] : vector<8x8xf32> to vector<8xf32>
    %83 = vector.shape_cast %82 : vector<8xf32> to vector<8x1xf32>
    %84 = vector.broadcast %83 : vector<8x1xf32> to vector<8x8xf32>
    %85 = arith.subf %81, %84 : vector<8x8xf32>
    %86 = math.exp %85 : vector<8x8xf32>
    %cst_32 = arith.constant dense<0.000000e+00> : vector<8xf32>
    %87 = vector.multi_reduction <add>, %86, %cst_32 [1] : vector<8x8xf32> to vector<8xf32>
    %88 = vector.shape_cast %87 : vector<8xf32> to vector<8x1xf32>
    %89 = arith.truncf %86 : vector<8x8xf32> to vector<8x8xbf16>
    %cst_33 = arith.constant dense<0.000000e+00> : vector<8x8xf32>
    %90 = tpu.matmul %89, %78, %cst_33 {dimension_numbers = #tpu.dot_dimension_numbers<[1], [0], [0], [1], [0, 0, 1, 1], [], []>} : vector<8x8xbf16>, vector<8x8xbf16>, vector<8x8xf32> -> vector<8x8xf32>
    %91 = tpu.reciprocal %88 {approx = true} : vector<8x1xf32> -> vector<8x1xf32>
    %92 = vector.broadcast %91 : vector<8x1xf32> to vector<8x8xf32>
    %93 = arith.mulf %90, %92 : vector<8x8xf32>
    %94 = arith.truncf %93 : vector<8x8xf32> to vector<8x8xbf16>
    %c0_34 = arith.constant 0 : index
    %c24 = arith.constant 24 : index
    %95 = vector.load %arg17[%c0_34, %c24] : memref<8x32xbf16, #tpu.memory_space<vmem>>, vector<8x8xbf16>
    tpu.vector_store %arg17[%c0_34, %c24], %94 {strides = array<i32>} : memref<8x32xbf16, #tpu.memory_space<vmem>>, vector<8x8xbf16>,
    %c0_35 = arith.constant 0 : index
    %c0_36 = arith.constant 0 : index
    %96 = vector.load %arg17[%c0_35, %c0_36] : memref<8x32xbf16, #tpu.memory_space<vmem>>, vector<8x32xbf16>
    %c0_37 = arith.constant 0 : index
    %c0_38 = arith.constant 0 : index
    %97 = vector.load %arg12[%c0_37, %c0_38] : memref<32x32xbf16, #tpu.memory_space<vmem>>, vector<32x32xbf16>
    %cst_39 = arith.constant dense<0.000000e+00> : vector<8x32xf32>
    %98 = tpu.matmul %96, %97, %cst_39 {dimension_numbers = #tpu.dot_dimension_numbers<[1], [0], [0], [1], [0, 0, 1, 1], [], []>} : vector<8x32xbf16>, vector<32x32xbf16>, vector<8x32xf32> -> vector<8x32xf32>
    %c0_40 = arith.constant 0 : index
    %c0_41 = arith.constant 0 : index
    %99 = vector.load %arg13[%c0_40, %c0_41] : memref<1x32xf32, #tpu.memory_space<vmem>>, vector<1x32xf32>
    %100 = vector.broadcast %99 : vector<1x32xf32> to vector<8x32xf32>
    %101 = arith.addf %98, %100 : vector<8x32xf32>
    %c0_42 = arith.constant 0 : index
    %c0_43 = arith.constant 0 : index
    %c0_44 = arith.constant 0 : index
    %102 = vector.load %arg14[%c0_42, %c0_43, %c0_44] : memref<1x8x32xf32, #tpu.memory_space<vmem>>, vector<1x8x32xf32>
    %103 = vector.shape_cast %102 : vector<1x8x32xf32> to vector<8x32xf32>
    %104 = vector.shape_cast %101 : vector<8x32xf32> to vector<1x8x32xf32>
    tpu.vector_store %arg14[%c0_42, %c0_43, %c0_44], %104 {strides = array<i32>} : memref<1x8x32xf32, #tpu.memory_space<vmem>>, vector<1x8x32xf32>,
    return
  }
  func.func @transform_0(%arg0: i32, %arg1: i32) -> (i32, i32, i32) {
    %c0_i32 = arith.constant 0 : i32
    %c0_i32_0 = arith.constant 0 : i32
    return %arg0, %arg1, %c0_i32 : i32, i32, i32
  }
  func.func @transform_1(%arg0: i32, %arg1: i32) -> (i32, i32, i32) {
    %c0_i32 = arith.constant 0 : i32
    %c0_i32_0 = arith.constant 0 : i32
    %c0_i32_1 = arith.constant 0 : i32
    return %arg0, %c0_i32, %c0_i32_0 : i32, i32, i32
  }
  func.func @transform_2(%arg0: i32, %arg1: i32) -> (i32, i32, i32) {
    %c0_i32 = arith.constant 0 : i32
    %c0_i32_0 = arith.constant 0 : i32
    %c0_i32_1 = arith.constant 0 : i32
    return %arg0, %c0_i32, %c0_i32_0 : i32, i32, i32
  }
  func.func @transform_3(%arg0: i32, %arg1: i32) -> (i32, i32, i32) {
    %c0_i32 = arith.constant 0 : i32
    %c0_i32_0 = arith.constant 0 : i32
    %c0_i32_1 = arith.constant 0 : i32
    return %arg0, %c0_i32, %c0_i32_0 : i32, i32, i32
  }
  func.func @transform_4(%arg0: i32, %arg1: i32) -> (i32, i32) {
    %c0_i32 = arith.constant 0 : i32
    %c0_i32_0 = arith.constant 0 : i32
    %c0_i32_1 = arith.constant 0 : i32
    return %c0_i32, %c0_i32_0 : i32, i32
  }
  func.func @transform_5(%arg0: i32, %arg1: i32) -> (i32, i32) {
    %c0_i32 = arith.constant 0 : i32
    %c0_i32_0 = arith.constant 0 : i32
    %c0_i32_1 = arith.constant 0 : i32
    return %c0_i32, %c0_i32_0 : i32, i32
  }
  func.func @transform_6(%arg0: i32, %arg1: i32) -> (i32, i32) {
    %c0_i32 = arith.constant 0 : i32
    %c0_i32_0 = arith.constant 0 : i32
    %c0_i32_1 = arith.constant 0 : i32
    return %c0_i32, %c0_i32_0 : i32, i32
  }
  func.func @transform_7(%arg0: i32, %arg1: i32) -> (i32, i32) {
    %c0_i32 = arith.constant 0 : i32
    %c0_i32_0 = arith.constant 0 : i32
    %c0_i32_1 = arith.constant 0 : i32
    return %c0_i32, %c0_i32_0 : i32, i32
  }
  func.func @transform_8(%arg0: i32, %arg1: i32) -> (i32, i32) {
    %c0_i32 = arith.constant 0 : i32
    %c0_i32_0 = arith.constant 0 : i32
    %c0_i32_1 = arith.constant 0 : i32
    return %c0_i32, %c0_i32_0 : i32, i32
  }
  func.func @transform_9(%arg0: i32, %arg1: i32) -> (i32, i32) {
    %c0_i32 = arith.constant 0 : i32
    %c0_i32_0 = arith.constant 0 : i32
    %c0_i32_1 = arith.constant 0 : i32
    return %c0_i32, %c0_i32_0 : i32, i32
  }
  func.func @transform_10(%arg0: i32, %arg1: i32) -> (i32, i32) {
    %c0_i32 = arith.constant 0 : i32
    %c0_i32_0 = arith.constant 0 : i32
    %c0_i32_1 = arith.constant 0 : i32
    return %c0_i32, %c0_i32_0 : i32, i32
  }
  func.func @transform_11(%arg0: i32, %arg1: i32) -> (i32, i32) {
    %c0_i32 = arith.constant 0 : i32
    %c0_i32_0 = arith.constant 0 : i32
    %c0_i32_1 = arith.constant 0 : i32
    return %c0_i32, %c0_i32_0 : i32, i32
  }
  func.func @transform_12(%arg0: i32, %arg1: i32) -> (i32, i32, i32) {
    %c0_i32 = arith.constant 0 : i32
    %c0_i32_0 = arith.constant 0 : i32
    return %arg0, %arg1, %c0_i32 : i32, i32, i32
  }
}

</mosaic_0001>

<llo_original>
// kernel: tpu_custom_call.1
$region0: #{tpu_custom_call.1}
  #allocation0 [shape = 'u32[]', space=smem, size = 0x4, offset = 0x4, fixed_abs, tag = 'smem constant byte address 0x4 - core index']
  #allocation1 [shape = 'u32[72,128]{1,0:T(1,128)}', space=vmem, size = 0x9000, scoped, tag = 'internal scratch']
  #allocation2 [shape = 'bf16[8,32]{1,0:T(8,128)(2,1)}', space=vmem, size = 0x800, scoped, tag = 'scratch operand']
  #allocation3 [shape = 'bf16[8,32]{1,0:T(8,128)(2,1)}', space=vmem, size = 0x800, scoped, tag = 'scratch operand']
  #allocation4 [shape = 'bf16[8,32]{1,0:T(8,128)(2,1)}', space=vmem, size = 0x800, scoped, tag = 'scratch operand']
  %s0 = inlined_call_operand.hbm [shape: f32[2,8,32], index: 0, kind: input, shape index: {}]
  %s1 = inlined_call_operand.hbm [shape: f32[2,8,32], index: 1, kind: input, shape index: {}]
  %s2 = inlined_call_operand.hbm [shape: f32[2,8,32], index: 2, kind: input, shape index: {}]
  %s3 = inlined_call_operand.vmem [shape: f32[2,1,8], index: 3, kind: input, shape index: {}]
  %s4 = inlined_call_operand.hbm [shape: bf16[32,32], index: 4, kind: input, shape index: {}]
  %s5 = inlined_call_operand.vmem [shape: f32[1,32], index: 5, kind: input, shape index: {}]
  %s6 = inlined_call_operand.hbm [shape: bf16[32,32], index: 6, kind: input, shape index: {}]
  %s7 = inlined_call_operand.vmem [shape: f32[1,32], index: 7, kind: input, shape index: {}]
  %s8 = inlined_call_operand.hbm [shape: bf16[32,32], index: 8, kind: input, shape index: {}]
  %s9 = inlined_call_operand.vmem [shape: f32[1,32], index: 9, kind: input, shape index: {}]
  %s10 = inlined_call_operand.hbm [shape: bf16[32,32], index: 10, kind: input, shape index: {}]
  %s11 = inlined_call_operand.vmem [shape: f32[1,32], index: 11, kind: input, shape index: {}]
  %s12 = inlined_call_operand.hbm [shape: f32[2,8,32], index: 12, kind: output, shape index: {}]
  %s13 = sld [smem:[#allocation0]]
  $region113: #{tpu_custom_call.1} parent=0
    _
  %s15 = ssub.s32 1, %s13
  %s16 = scalar_select 0, %s15, %s13
  $region1: #{tpu_custom_call.1} parent=0
    #allocation5 [shape = 'u8[8192]{0}', space=vmem, size = 0x2000, scoped, tag = 'input window, operand 0']
    #allocation6 [shape = 's32[2]{0}', space=sflag, size = 0x8, scoped, tag = 'scoped memory for tpu_custom_call.1']
    #allocation7 [shape = 's32[2]{0}', space=sflag, size = 0x8, scoped, tag = 'scoped memory for tpu_custom_call.1']
    #allocation8 [shape = 'u8[8192]{0}', space=vmem, size = 0x2000, scoped, tag = 'input window, operand 1']
    #allocation9 [shape = 's32[2]{0}', space=sflag, size = 0x8, scoped, tag = 'scoped memory for tpu_custom_call.1']
    #allocation10 [shape = 'u8[8192]{0}', space=vmem, size = 0x2000, scoped, tag = 'input window, operand 2']
    #allocation11 [shape = 'u8[8192]{0}', space=vmem, size = 0x2000, scoped, tag = 'input window, operand 4, single buffered']
    #allocation12 [shape = 's32[1]{0}', space=sflag, size = 0x4, scoped, tag = 'scoped memory for tpu_custom_call.1']
    #allocation13 [shape = 'u8[8192]{0}', space=vmem, size = 0x2000, scoped, tag = 'input window, operand 6, single buffered']
    #allocation14 [shape = 'u8[8192]{0}', space=vmem, size = 0x2000, scoped, tag = 'input window, operand 8, single buffered']
    #allocation15 [shape = 's32[1]{0}', space=sflag, size = 0x4, scoped, tag = 'scoped memory for tpu_custom_call.1']
    #allocation16 [shape = 'u8[8192]{0}', space=vmem, size = 0x2000, scoped, tag = 'input window, operand 10, single buffered']
    #allocation17 [shape = 'u8[8192]{0}', space=vmem, size = 0x2000, scoped, tag = 'output window, operand 0']
    %17 = vsyncpa [#allocation6], 0
    %s18 = scalar_lea.sflag [#allocation6], 1
    %19 = vsyncpa %s18, 0
    %20 = vsyncpa [#allocation9], 0
    %s21 = scalar_lea.sflag [#allocation9], 1
    %22 = vsyncpa %s21, 0
    %23 = vsyncpa [#allocation12], 0
    %24 = vsyncpa [#allocation15], 0
    %25 = vsyncpa [#allocation7], 0
    %s26 = scalar_lea.sflag [#allocation7], 1
    %27 = vsyncpa %s26, 0
    loop: start=0, step=1, limit=4
    $region2: #{tpu_custom_call.1} parent=1 // loop_pre_header
      _
    $region3: #{tpu_custom_call.1} parent=1 // loop_header
      %s29 = sphi 0, %s33
      %p30 = scmp.ge.s32.totalorder %s29, 4
      %s36 = sphi 0, %s48
      %s37 = sphi 0, %s44
      %s38 = sphi 0, %s36
      %s39 = sphi 0, %s37
      %s40 = sphi 0, %s38
      %s41 = sphi 0, %s39
      %s53 = sphi 0, %s55
      %s56 = sphi 0, %s53
      %s57 = sphi 0, %s56
      %s73 = sphi 0, %s57
      %s79 = sphi 0, %s81
      %s82 = sphi 0, %s79
      %s83 = sphi 0, %s82
      %s99 = sphi 0, %s83
      %s105 = sphi 0, %s107
      %s108 = sphi 0, %s105
      %s109 = sphi 0, %s108
      %s125 = sphi 0, %s109
      %s131 = sphi 0, %s133
      %s134 = sphi 0, %s131
      %s135 = sphi 0, %s134
      %s151 = sphi 0, %s135
      %s155 = sphi 0, %s155
      %s157 = sphi 0, %s155
      %s158 = sphi 0, %s157
      %s172 = sphi 0, %s158
      %s176 = sphi 0, %s176
      %s178 = sphi 0, %s176
      %s179 = sphi 0, %s178
      %s193 = sphi 0, %s179
      %s197 = sphi 0, %s197
      %s199 = sphi 0, %s197
      %s200 = sphi 0, %s199
      %s214 = sphi 0, %s200
      %s218 = sphi 0, %s218
      %s220 = sphi 0, %s218
      %s221 = sphi 0, %s220
      %s235 = sphi 0, %s221
      %s239 = sphi 0, %s239
      %s241 = sphi 0, %s239
      %s242 = sphi 0, %s241
      %s256 = sphi 0, %s242
      %s260 = sphi 0, %s260
      %s262 = sphi 0, %s260
      %s263 = sphi 0, %s262
      %s277 = sphi 0, %s263
      %s281 = sphi 0, %s281
      %s283 = sphi 0, %s281
      %s284 = sphi 0, %s283
      %s298 = sphi 0, %s284
      %s302 = sphi 0, %s302
      %s304 = sphi 0, %s302
      %s305 = sphi 0, %s304
      %s319 = sphi 0, %s305
      %s327 = sphi 0, %s329
      %s330 = sphi 0, %s327
      %s331 = sphi 0, %s330
      %s347 = sphi 0, %s331
    $region4: #{tpu_custom_call.1} parent=1 // loop_header_branch
      %32 = sbr.rel (%p30) target = $region8
    $region5: #{tpu_custom_call.1} parent=1 // loop_body
      %s34 = ssub.s32 %s29, 1
      %s35 = ssub.s32 %s29, 2
      %s42 = sadd.s32 1, %s37
      %p43 = scmp.ge.s32.totalorder %s42, 1
      %s44 = scalar_select %p43, 0, %s42
      %s45 = sadd.s32 1, %s36
      %s46 = scalar_select %p43, %s45, %s36
      %p47 = scmp.ge.s32.totalorder %s46, 2
      %s48 = scalar_select %p47, 0, %s46
      %s49 = ssub.s32 %s36, %s48
      %s50 = ssub.s32 %s37, %s44
      %s51 = sor.u32 %s49, %s50
      %p52 = scmp.eq.s32.totalorder %s51, 0
      %s54 = sadd.s32 %s53, 1
      %s55 = scalar_select %p52, %s53, %s54
      %p58 = pneg %p52
      %p59 = scmp.eq.s32.totalorder %s29, 1
      %p60 = por %p58, %p59
      %p61 = scmp.ne.s32.totalorder %s53, %s56
      %p62 = scmp.eq.s32.totalorder %s29, 0
      %p63 = por %p61, %p62
      %p64 = scmp.ne.s32.totalorder %s53, %s56
      %p65 = scmp.eq.s32.totalorder %s34, 1
      %p66 = por %p64, %p65
      %p67 = scmp.ne.s32.totalorder %s56, %s57
      %p68 = scmp.eq.s32.totalorder %s34, 0
      %p69 = por %p67, %p68
      %p70 = scmp.ne.s32.totalorder %s56, %s57
      %p71 = scmp.eq.s32.totalorder %s35, 1
      %p72 = por %p70, %p71
      %p74 = scmp.ne.s32.totalorder %s57, %s73
      %p75 = scmp.eq.s32.totalorder %s35, 0
      %p76 = por %p74, %p75
      %s77 = ssub.s32 %s36, %s48
      %p78 = scmp.eq.s32.totalorder %s77, 0
      %s80 = sadd.s32 %s79, 1
      %s81 = scalar_select %p78, %s79, %s80
      %p84 = pneg %p78
      %p85 = scmp.eq.s32.totalorder %s29, 1
      %p86 = por %p84, %p85
      %p87 = scmp.ne.s32.totalorder %s79, %s82
      %p88 = scmp.eq.s32.totalorder %s29, 0
      %p89 = por %p87, %p88
      %p90 = scmp.ne.s32.totalorder %s79, %s82
      %p91 = scmp.eq.s32.totalorder %s34, 1
      %p92 = por %p90, %p91
      %p93 = scmp.ne.s32.totalorder %s82, %s83
      %p94 = scmp.eq.s32.totalorder %s34, 0
      %p95 = por %p93, %p94
      %p96 = scmp.ne.s32.totalorder %s82, %s83
      %p97 = scmp.eq.s32.totalorder %s35, 1
      %p98 = por %p96, %p97
      %p100 = scmp.ne.s32.totalorder %s83, %s99
      %p101 = scmp.eq.s32.totalorder %s35, 0
      %p102 = por %p100, %p101
      %s103 = ssub.s32 %s36, %s48
      %p104 = scmp.eq.s32.totalorder %s103, 0
      %s106 = sadd.s32 %s105, 1
      %s107 = scalar_select %p104, %s105, %s106
      %p110 = pneg %p104
      %p111 = scmp.eq.s32.totalorder %s29, 1
      %p112 = por %p110, %p111
      %p113 = scmp.ne.s32.totalorder %s105, %s108
      %p114 = scmp.eq.s32.totalorder %s29, 0
      %p115 = por %p113, %p114
      %p116 = scmp.ne.s32.totalorder %s105, %s108
      %p117 = scmp.eq.s32.totalorder %s34, 1
      %p118 = por %p116, %p117
      %p119 = scmp.ne.s32.totalorder %s108, %s109
      %p120 = scmp.eq.s32.totalorder %s34, 0
      %p121 = por %p119, %p120
      %p122 = scmp.ne.s32.totalorder %s108, %s109
      %p123 = scmp.eq.s32.totalorder %s35, 1
      %p124 = por %p122, %p123
      %p126 = scmp.ne.s32.totalorder %s109, %s125
      %p127 = scmp.eq.s32.totalorder %s35, 0
      %p128 = por %p126, %p127
      %s129 = ssub.s32 %s36, %s48
      %p130 = scmp.eq.s32.totalorder %s129, 0
      %s132 = sadd.s32 %s131, 1
      %s133 = scalar_select %p130, %s131, %s132
      %p136 = pneg %p130
      %p137 = scmp.eq.s32.totalorder %s29, 1
      %p138 = por %p136, %p137
      %p139 = scmp.ne.s32.totalorder %s131, %s134
      %p140 = scmp.eq.s32.totalorder %s29, 0
      %p141 = por %p139, %p140
      %p142 = scmp.ne.s32.totalorder %s131, %s134
      %p143 = scmp.eq.s32.totalorder %s34, 1
      %p144 = por %p142, %p143
      %p145 = scmp.ne.s32.totalorder %s134, %s135
      %p146 = scmp.eq.s32.totalorder %s34, 0
      %p147 = por %p145, %p146
      %p148 = scmp.ne.s32.totalorder %s134, %s135
      %p149 = scmp.eq.s32.totalorder %s35, 1
      %p150 = por %p148, %p149
      %p152 = scmp.ne.s32.totalorder %s135, %s151
      %p153 = scmp.eq.s32.totalorder %s35, 0
      %p154 = por %p152, %p153
      %s156 = sadd.s32 %s155, 1
      %p159 = scmp.eq.s32.totalorder %s29, 1
      %p160 = scmp.ne.s32.totalorder %s155, %s157
      %p161 = scmp.eq.s32.totalorder %s29, 0
      %p162 = por %p160, %p161
      %p163 = scmp.ne.s32.totalorder %s155, %s157
      %p164 = scmp.eq.s32.totalorder %s34, 1
      %p165 = por %p163, %p164
      %p166 = scmp.ne.s32.totalorder %s157, %s158
      %p167 = scmp.eq.s32.totalorder %s34, 0
      %p168 = por %p166, %p167
      %p169 = scmp.ne.s32.totalorder %s157, %s158
      %p170 = scmp.eq.s32.totalorder %s35, 1
      %p171 = por %p169, %p170
      %p173 = scmp.ne.s32.totalorder %s158, %s172
      %p174 = scmp.eq.s32.totalorder %s35, 0
      %p175 = por %p173, %p174
      %s177 = sadd.s32 %s176, 1
      %p180 = scmp.eq.s32.totalorder %s29, 1
      %p181 = scmp.ne.s32.totalorder %s176, %s178
      %p182 = scmp.eq.s32.totalorder %s29, 0
      %p183 = por %p181, %p182
      %p184 = scmp.ne.s32.totalorder %s176, %s178
      %p185 = scmp.eq.s32.totalorder %s34, 1
      %p186 = por %p184, %p185
      %p187 = scmp.ne.s32.totalorder %s178, %s179
      %p188 = scmp.eq.s32.totalorder %s34, 0
      %p189 = por %p187, %p188
      %p190 = scmp.ne.s32.totalorder %s178, %s179
      %p191 = scmp.eq.s32.totalorder %s35, 1
      %p192 = por %p190, %p191
      %p194 = scmp.ne.s32.totalorder %s179, %s193
      %p195 = scmp.eq.s32.totalorder %s35, 0
      %p196 = por %p194, %p195
      %s198 = sadd.s32 %s197, 1
      %p201 = scmp.eq.s32.totalorder %s29, 1
      %p202 = scmp.ne.s32.totalorder %s197, %s199
      %p203 = scmp.eq.s32.totalorder %s29, 0
      %p204 = por %p202, %p203
      %p205 = scmp.ne.s32.totalorder %s197, %s199
      %p206 = scmp.eq.s32.totalorder %s34, 1
      %p207 = por %p205, %p206
      %p208 = scmp.ne.s32.totalorder %s199, %s200
      %p209 = scmp.eq.s32.totalorder %s34, 0
      %p210 = por %p208, %p209
      %p211 = scmp.ne.s32.totalorder %s199, %s200
      %p212 = scmp.eq.s32.totalorder %s35, 1
      %p213 = por %p211, %p212
      %p215 = scmp.ne.s32.totalorder %s200, %s214
      %p216 = scmp.eq.s32.totalorder %s35, 0
      %p217 = por %p215, %p216
      %s219 = sadd.s32 %s218, 1
      %p222 = scmp.eq.s32.totalorder %s29, 1
      %p223 = scmp.ne.s32.totalorder %s218, %s220
      %p224 = scmp.eq.s32.totalorder %s29, 0
      %p225 = por %p223, %p224
      %p226 = scmp.ne.s32.totalorder %s218, %s220
      %p227 = scmp.eq.s32.totalorder %s34, 1
      %p228 = por %p226, %p227
      %p229 = scmp.ne.s32.totalorder %s220, %s221
      %p230 = scmp.eq.s32.totalorder %s34, 0
      %p231 = por %p229, %p230
      %p232 = scmp.ne.s32.totalorder %s220, %s221
      %p233 = scmp.eq.s32.totalorder %s35, 1
      %p234 = por %p232, %p233
      %p236 = scmp.ne.s32.totalorder %s221, %s235
      %p237 = scmp.eq.s32.totalorder %s35, 0
      %p238 = por %p236, %p237
      %s240 = sadd.s32 %s239, 1
      %p243 = scmp.eq.s32.totalorder %s29, 1
      %p244 = scmp.ne.s32.totalorder %s239, %s241
      %p245 = scmp.eq.s32.totalorder %s29, 0
      %p246 = por %p244, %p245
      %p247 = scmp.ne.s32.totalorder %s239, %s241
      %p248 = scmp.eq.s32.totalorder %s34, 1
      %p249 = por %p247, %p248
      %p250 = scmp.ne.s32.totalorder %s241, %s242
      %p251 = scmp.eq.s32.totalorder %s34, 0
      %p252 = por %p250, %p251
      %p253 = scmp.ne.s32.totalorder %s241, %s242
      %p254 = scmp.eq.s32.totalorder %s35, 1
      %p255 = por %p253, %p254
      %p257 = scmp.ne.s32.totalorder %s242, %s256
      %p258 = scmp.eq.s32.totalorder %s35, 0
      %p259 = por %p257, %p258
      %s261 = sadd.s32 %s260, 1
      %p264 = scmp.eq.s32.totalorder %s29, 1
      %p265 = scmp.ne.s32.totalorder %s260, %s262
      %p266 = scmp.eq.s32.totalorder %s29, 0
      %p267 = por %p265, %p266
      %p268 = scmp.ne.s32.totalorder %s260, %s262
      %p269 = scmp.eq.s32.totalorder %s34, 1
      %p270 = por %p268, %p269
      %p271 = scmp.ne.s32.totalorder %s262, %s263
      %p272 = scmp.eq.s32.totalorder %s34, 0
      %p273 = por %p271, %p272
      %p274 = scmp.ne.s32.totalorder %s262, %s263
      %p275 = scmp.eq.s32.totalorder %s35, 1
      %p276 = por %p274, %p275
      %p278 = scmp.ne.s32.totalorder %s263, %s277
      %p279 = scmp.eq.s32.totalorder %s35, 0
      %p280 = por %p278, %p279
      %s282 = sadd.s32 %s281, 1
      %p285 = scmp.eq.s32.totalorder %s29, 1
      %p286 = scmp.ne.s32.totalorder %s281, %s283
      %p287 = scmp.eq.s32.totalorder %s29, 0
      %p288 = por %p286, %p287
      %p289 = scmp.ne.s32.totalorder %s281, %s283
      %p290 = scmp.eq.s32.totalorder %s34, 1
      %p291 = por %p289, %p290
      %p292 = scmp.ne.s32.totalorder %s283, %s284
      %p293 = scmp.eq.s32.totalorder %s34, 0
      %p294 = por %p292, %p293
      %p295 = scmp.ne.s32.totalorder %s283, %s284
      %p296 = scmp.eq.s32.totalorder %s35, 1
      %p297 = por %p295, %p296
      %p299 = scmp.ne.s32.totalorder %s284, %s298
      %p300 = scmp.eq.s32.totalorder %s35, 0
      %p301 = por %p299, %p300
      %s303 = sadd.s32 %s302, 1
      %p306 = scmp.eq.s32.totalorder %s29, 1
      %p307 = scmp.ne.s32.totalorder %s302, %s304
      %p308 = scmp.eq.s32.totalorder %s29, 0
      %p309 = por %p307, %p308
      %p310 = scmp.ne.s32.totalorder %s302, %s304
      %p311 = scmp.eq.s32.totalorder %s34, 1
      %p312 = por %p310, %p311
      %p313 = scmp.ne.s32.totalorder %s304, %s305
      %p314 = scmp.eq.s32.totalorder %s34, 0
      %p315 = por %p313, %p314
      %p316 = scmp.ne.s32.totalorder %s304, %s305
      %p317 = scmp.eq.s32.totalorder %s35, 1
      %p318 = por %p316, %p317
      %p320 = scmp.ne.s32.totalorder %s305, %s319
      %p321 = scmp.eq.s32.totalorder %s35, 0
      %p322 = por %p320, %p321
      %s323 = ssub.s32 %s36, %s48
      %s324 = ssub.s32 %s37, %s44
      %s325 = sor.u32 %s323, %s324
      %p326 = scmp.eq.s32.totalorder %s325, 0
      %s328 = sadd.s32 %s327, 1
      %s329 = scalar_select %p326, %s327, %s328
      %p332 = pneg %p326
      %p333 = scmp.eq.s32.totalorder %s29, 1
      %p334 = por %p332, %p333
      %p335 = scmp.ne.s32.totalorder %s327, %s330
      %p336 = scmp.eq.s32.totalorder %s29, 0
      %p337 = por %p335, %p336
      %p338 = scmp.ne.s32.totalorder %s327, %s330
      %p339 = scmp.eq.s32.totalorder %s34, 1
      %p340 = por %p338, %p339
      %p341 = scmp.ne.s32.totalorder %s330, %s331
      %p342 = scmp.eq.s32.totalorder %s34, 0
      %p343 = por %p341, %p342
      %p344 = scmp.ne.s32.totalorder %s330, %s331
      %p345 = scmp.eq.s32.totalorder %s35, 1
      %p346 = por %p344, %p345
      %p348 = scmp.ne.s32.totalorder %s331, %s347
      %p349 = scmp.eq.s32.totalorder %s35, 0
      %p350 = por %p348, %p349
      %p351 = scmp.le.s32.totalorder 1, %s29
      %p352 = scmp.lt.s32.totalorder %s29, 3
      %p353 = pnand %p351, %p352
      %p354 = pneg %p353
      // Predicated region
      $region9: #{tpu_custom_call.1} parent=5 // pred_check
        _
      $region10: #{tpu_custom_call.1} parent=5 // pred_check_branch
        %356 = sbr.rel (%p353) target = $region12
      $region11: #{tpu_custom_call.1} parent=5 // pred_region
        %s357 = ssub.s32 %s29, 1
        // Predicated region
        $region13: #{tpu_custom_call.1} parent=11 // pred_check
          %p358 = pneg %p168
        $region14: #{tpu_custom_call.1} parent=11 // pred_check_branch
          %360 = sbr.rel (%p358) target = $region16
        $region15: #{tpu_custom_call.1} parent=11 // pred_region
          %362 = vsyncadd [#allocation12], 0
          %s363 = sshll.u32 %s4, 4
          %s364 = int_to_ptr.hbm [resolvable:$true] %s363
          %s365 = sshll.u32 [#allocation11], 4
          %s366 = int_to_ptr.vmem [resolvable:$true] %s365
          %371 = dma.hbm_to_vmem [thread:$0]  %s364, 256, %s366, [#allocation12], 64, 64, 4
        $region16: #{tpu_custom_call.1} parent=11 // pred_fallthru
          _
        // Predicated region
        $region17: #{tpu_custom_call.1} parent=11 // pred_check
          %p372 = pneg %p189
        $region18: #{tpu_custom_call.1} parent=11 // pred_check_branch
          %374 = sbr.rel (%p372) target = $region20
        $region19: #{tpu_custom_call.1} parent=11 // pred_region
          _
        $region20: #{tpu_custom_call.1} parent=11 // pred_fallthru
          _
        // Predicated region
        $region21: #{tpu_custom_call.1} parent=11 // pred_check
          %p375 = pneg %p210
        $region22: #{tpu_custom_call.1} parent=11 // pred_check_branch
          %377 = sbr.rel (%p375) target = $region24
        $region23: #{tpu_custom_call.1} parent=11 // pred_region
          %379 = vsyncadd [#allocation12], 0
          %s380 = sshll.u32 %s6, 4
          %s381 = int_to_ptr.hbm [resolvable:$true] %s380
          %s382 = sshll.u32 [#allocation13], 4
          %s383 = int_to_ptr.vmem [resolvable:$true] %s382
          %388 = dma.hbm_to_vmem [thread:$0]  %s381, 256, %s383, [#allocation12], 64, 64, 4
        $region24: #{tpu_custom_call.1} parent=11 // pred_fallthru
          _
        // Predicated region
        $region25: #{tpu_custom_call.1} parent=11 // pred_check
          %p389 = pneg %p231
        $region26: #{tpu_custom_call.1} parent=11 // pred_check_branch
          %391 = sbr.rel (%p389) target = $region28
        $region27: #{tpu_custom_call.1} parent=11 // pred_region
          _
        $region28: #{tpu_custom_call.1} parent=11 // pred_fallthru
          _
        // Predicated region
        $region29: #{tpu_custom_call.1} parent=11 // pred_check
          %p392 = pneg %p252
        $region30: #{tpu_custom_call.1} parent=11 // pred_check_branch
          %394 = sbr.rel (%p392) target = $region32
        $region31: #{tpu_custom_call.1} parent=11 // pred_region
          %396 = vsyncadd [#allocation15], 0
          %s397 = sshll.u32 %s8, 4
          %s398 = int_to_ptr.hbm [resolvable:$true] %s397
          %s399 = sshll.u32 [#allocation14], 4
          %s400 = int_to_ptr.vmem [resolvable:$true] %s399
          %405 = dma.hbm_to_vmem [thread:$0]  %s398, 256, %s400, [#allocation15], 64, 64, 4
        $region32: #{tpu_custom_call.1} parent=11 // pred_fallthru
          _
        // Predicated region
        $region33: #{tpu_custom_call.1} parent=11 // pred_check
          %p406 = pneg %p273
        $region34: #{tpu_custom_call.1} parent=11 // pred_check_branch
          %408 = sbr.rel (%p406) target = $region36
        $region35: #{tpu_custom_call.1} parent=11 // pred_region
          _
        $region36: #{tpu_custom_call.1} parent=11 // pred_fallthru
          _
        // Predicated region
        $region37: #{tpu_custom_call.1} parent=11 // pred_check
          %p409 = pneg %p294
        $region38: #{tpu_custom_call.1} parent=11 // pred_check_branch
          %411 = sbr.rel (%p409) target = $region40
        $region39: #{tpu_custom_call.1} parent=11 // pred_region
          %413 = vsyncadd [#allocation15], 0
          %s414 = sshll.u32 %s10, 4
          %s415 = int_to_ptr.hbm [resolvable:$true] %s414
          %s416 = sshll.u32 [#allocation16], 4
          %s417 = int_to_ptr.vmem [resolvable:$true] %s416
          %422 = dma.hbm_to_vmem [thread:$0]  %s415, 256, %s417, [#allocation15], 64, 64, 4
        $region40: #{tpu_custom_call.1} parent=11 // pred_fallthru
          _
        // Predicated region
        $region41: #{tpu_custom_call.1} parent=11 // pred_check
          %p423 = pneg %p315
        $region42: #{tpu_custom_call.1} parent=11 // pred_check_branch
          %425 = sbr.rel (%p423) target = $region44
        $region43: #{tpu_custom_call.1} parent=11 // pred_region
          _
        $region44: #{tpu_custom_call.1} parent=11 // pred_fallthru
          _
      $region12: #{tpu_custom_call.1} parent=5 // pred_fallthru
        _
      %p426 = scmp.lt.s32.totalorder %s29, 2
      // Predicated region
      $region45: #{tpu_custom_call.1} parent=5 // pred_check
        %p427 = pneg %p426
      $region46: #{tpu_custom_call.1} parent=5 // pred_check_branch
        %429 = sbr.rel (%p427) target = $region48
      $region47: #{tpu_custom_call.1} parent=5 // pred_region
        // Predicated region
        $region49: #{tpu_custom_call.1} parent=47 // pred_check
          %p430 = pneg %p63
        $region50: #{tpu_custom_call.1} parent=47 // pred_check_branch
          %432 = sbr.rel (%p430) target = $region52
        $region51: #{tpu_custom_call.1} parent=47 // pred_region
          %s433 = sand.u32 %s53, 1
          %s434 = scalar_lea.sflag [#allocation6], %s433
          %s435 = sand.u32 %s53, 1
          %s436 = smul.addr %s435, 8
          %s437 = scalar_lea.vmem [#allocation5], %s436
          %439 = vsyncadd %s434, 0
          %s440 = sadd.s32 %s37, %s36
          %s441 = smul.addr %s440, 8
          %s442 = scalar_lea.hbm %s0, %s441
          %s444 = sshll.u32 %s442, 4
          %s445 = int_to_ptr.hbm [resolvable:$true] %s444
          %s446 = sshll.u32 %s437, 4
          %s447 = int_to_ptr.vmem [resolvable:$true] %s446
          %449 = dma.hbm_to_vmem [thread:$0]  %s445, 128, %s447, %s434
        $region52: #{tpu_custom_call.1} parent=47 // pred_fallthru
          _
        // Predicated region
        $region53: #{tpu_custom_call.1} parent=47 // pred_check
          %p450 = pneg %p89
        $region54: #{tpu_custom_call.1} parent=47 // pred_check_branch
          %452 = sbr.rel (%p450) target = $region56
        $region55: #{tpu_custom_call.1} parent=47 // pred_region
          %s453 = sand.u32 %s29, 1
          %s454 = scalar_lea.sflag [#allocation9], %s453
          %s455 = sand.u32 %s79, 1
          %s456 = smul.addr %s455, 8
          %s457 = scalar_lea.vmem [#allocation8], %s456
          %459 = vsyncadd %s454, 0
          %s460 = smul.addr %s36, 8
          %s461 = scalar_lea.hbm %s1, %s460
          %s463 = sshll.u32 %s461, 4
          %s464 = int_to_ptr.hbm [resolvable:$true] %s463
          %s465 = sshll.u32 %s457, 4
          %s466 = int_to_ptr.vmem [resolvable:$true] %s465
          %468 = dma.hbm_to_vmem [thread:$0]  %s464, 128, %s466, %s454
        $region56: #{tpu_custom_call.1} parent=47 // pred_fallthru
          _
        // Predicated region
        $region57: #{tpu_custom_call.1} parent=47 // pred_check
          %p469 = pneg %p115
        $region58: #{tpu_custom_call.1} parent=47 // pred_check_branch
          %471 = sbr.rel (%p469) target = $region60
        $region59: #{tpu_custom_call.1} parent=47 // pred_region
          %s472 = sand.u32 %s29, 1
          %s473 = scalar_lea.sflag [#allocation9], %s472
          %s474 = sand.u32 %s105, 1
          %s475 = smul.addr %s474, 8
          %s476 = scalar_lea.vmem [#allocation10], %s475
          %478 = vsyncadd %s473, 0
          %s479 = smul.addr %s36, 8
          %s480 = scalar_lea.hbm %s2, %s479
          %s482 = sshll.u32 %s480, 4
          %s483 = int_to_ptr.hbm [resolvable:$true] %s482
          %s484 = sshll.u32 %s476, 4
          %s485 = int_to_ptr.vmem [resolvable:$true] %s484
          %487 = dma.hbm_to_vmem [thread:$0]  %s483, 128, %s485, %s473
        $region60: #{tpu_custom_call.1} parent=47 // pred_fallthru
          _
        // Predicated region
        $region61: #{tpu_custom_call.1} parent=47 // pred_check
          %p488 = pneg %p141
        $region62: #{tpu_custom_call.1} parent=47 // pred_check_branch
          %490 = sbr.rel (%p488) target = $region64
        $region63: #{tpu_custom_call.1} parent=47 // pred_region
          %p491 = scmp.lt.s32.totalorder %s36, 1
          %s492 = scalar_select %p491, %s36, 1
          %s493 = scalar_lea.vmem %s3, %s492
        $region64: #{tpu_custom_call.1} parent=47 // pred_fallthru
          _
      $region48: #{tpu_custom_call.1} parent=5 // pred_fallthru
        _
      %p494 = scmp.le.s32.totalorder 1, %s29
      %p495 = scmp.lt.s32.totalorder %s29, 3
      %p496 = pnand %p494, %p495
      %p497 = pneg %p496
      // Predicated region
      $region65: #{tpu_custom_call.1} parent=5 // pred_check
        _
      $region66: #{tpu_custom_call.1} parent=5 // pred_check_branch
        %499 = sbr.rel (%p496) target = $region68
      $region67: #{tpu_custom_call.1} parent=5 // pred_region
        %s500 = ssub.s32 %s29, 1
        %s501 = sand.u32 %s56, 1
        %s502 = scalar_lea.sflag [#allocation6], %s501
        %s503 = sand.u32 %s56, 1
        %s504 = smul.addr %s503, 8
        %s505 = scalar_lea.vmem [#allocation5], %s504
        // Predicated region
        $region69: #{tpu_custom_call.1} parent=67 // pred_check
          %p506 = pneg %p69
        $region70: #{tpu_custom_call.1} parent=67 // pred_check_branch
          %508 = sbr.rel (%p506) target = $region72
        $region71: #{tpu_custom_call.1} parent=67 // pred_region
          %510 = dma.done %s502, 128
        $region72: #{tpu_custom_call.1} parent=67 // pred_fallthru
          _
        %s511 = sand.u32 %s34, 1
        %s512 = scalar_lea.sflag [#allocation9], %s511
        %s513 = sand.u32 %s82, 1
        %s514 = smul.addr %s513, 8
        %s515 = scalar_lea.vmem [#allocation8], %s514
        // Predicated region
        $region73: #{tpu_custom_call.1} parent=67 // pred_check
          %p516 = pneg %p95
        $region74: #{tpu_custom_call.1} parent=67 // pred_check_branch
          %518 = sbr.rel (%p516) target = $region76
        $region75: #{tpu_custom_call.1} parent=67 // pred_region
          %520 = dma.done %s512, 128
        $region76: #{tpu_custom_call.1} parent=67 // pred_fallthru
          _
        %s521 = sand.u32 %s34, 1
        %s522 = scalar_lea.sflag [#allocation9], %s521
        %s523 = sand.u32 %s108, 1
        %s524 = smul.addr %s523, 8
        %s525 = scalar_lea.vmem [#allocation10], %s524
        // Predicated region
        $region77: #{tpu_custom_call.1} parent=67 // pred_check
          %p526 = pneg %p121
        $region78: #{tpu_custom_call.1} parent=67 // pred_check_branch
          %528 = sbr.rel (%p526) target = $region80
        $region79: #{tpu_custom_call.1} parent=67 // pred_region
          %530 = dma.done %s522, 128
        $region80: #{tpu_custom_call.1} parent=67 // pred_fallthru
          _
        // Predicated region
        $region81: #{tpu_custom_call.1} parent=67 // pred_check
          %p531 = pneg %p168
        $region82: #{tpu_custom_call.1} parent=67 // pred_check_branch
          %533 = sbr.rel (%p531) target = $region84
        $region83: #{tpu_custom_call.1} parent=67 // pred_region
          %535 = dma.done [#allocation12], 256
        $region84: #{tpu_custom_call.1} parent=67 // pred_fallthru
          _
        // Predicated region
        $region85: #{tpu_custom_call.1} parent=67 // pred_check
          %p536 = pneg %p210
        $region86: #{tpu_custom_call.1} parent=67 // pred_check_branch
          %538 = sbr.rel (%p536) target = $region88
        $region87: #{tpu_custom_call.1} parent=67 // pred_region
          %540 = dma.done [#allocation12], 256
        $region88: #{tpu_custom_call.1} parent=67 // pred_fallthru
          _
        // Predicated region
        $region89: #{tpu_custom_call.1} parent=67 // pred_check
          %p541 = pneg %p252
        $region90: #{tpu_custom_call.1} parent=67 // pred_check_branch
          %543 = sbr.rel (%p541) target = $region92
        $region91: #{tpu_custom_call.1} parent=67 // pred_region
          %545 = dma.done [#allocation15], 256
        $region92: #{tpu_custom_call.1} parent=67 // pred_fallthru
          _
        // Predicated region
        $region93: #{tpu_custom_call.1} parent=67 // pred_check
          %p546 = pneg %p294
        $region94: #{tpu_custom_call.1} parent=67 // pred_check_branch
          %548 = sbr.rel (%p546) target = $region96
        $region95: #{tpu_custom_call.1} parent=67 // pred_region
          %550 = dma.done [#allocation15], 256
        $region96: #{tpu_custom_call.1} parent=67 // pred_fallthru
          _
        %s551 = sand.u32 %s56, 1
        %s552 = scalar_lea.sflag [#allocation6], %s551
        %s553 = sand.u32 %s56, 1
        %s554 = smul.addr %s553, 8
        %s555 = scalar_lea.vmem [#allocation5], %s554
        %p556 = pneg %p69
        %p557 = pneg %p66
        %s558 = sand.u32 %s34, 1
        %s559 = scalar_lea.sflag [#allocation9], %s558
        %s560 = sand.u32 %s82, 1
        %s561 = smul.addr %s560, 8
        %s562 = scalar_lea.vmem [#allocation8], %s561
        %p563 = pneg %p95
        %p564 = pneg %p92
        %s565 = sand.u32 %s34, 1
        %s566 = scalar_lea.sflag [#allocation9], %s565
        %s567 = sand.u32 %s108, 1
        %s568 = smul.addr %s567, 8
        %s569 = scalar_lea.vmem [#allocation10], %s568
        %p570 = pneg %p121
        %p571 = pneg %p118
        %p572 = scmp.lt.s32.totalorder %s38, 1
        %s573 = scalar_select %p572, %s38, 1
        %s574 = scalar_lea.vmem %s3, %s573
        %p575 = pneg %p147
        %p576 = pneg %p144
        %p577 = pneg %p168
        %p578 = pneg %p165
        %p579 = pneg %p189
        %p580 = pneg %p186
        %p581 = pneg %p210
        %p582 = pneg %p207
        %p583 = pneg %p231
        %p584 = pneg %p228
        %p585 = pneg %p252
        %p586 = pneg %p249
        %p587 = pneg %p273
        %p588 = pneg %p270
        %p589 = pneg %p294
        %p590 = pneg %p291
        %p591 = pneg %p315
        %p592 = pneg %p312
        %p593 = pneg %p343
        %p594 = pneg %p340
        %s595 = sand.u32 %s330, 1
        %s596 = scalar_lea.sflag [#allocation7], %s595
        %s597 = sand.u32 %s330, 1
        %s598 = smul.addr %s597, 8
        %s599 = scalar_lea.vmem [#allocation17], %s598
        %p600 = scmp.lt.s32.totalorder %s38, 1
        %s601 = scalar_select %p600, %s38, 1
        %s602 = scalar_lea.vmem %s3, %s601
        %p604 = scmp.eq.s32.totalorder %s39, 0
        // Predicated region
        $region97: #{tpu_custom_call.1} parent=67 // pred_check
          %p605 = pneg %p604
        $region98: #{tpu_custom_call.1} parent=67 // pred_check_branch
          %607 = sbr.rel (%p605) target = $region100
        $region99: #{tpu_custom_call.1} parent=67 // pred_region
          %v608 = vld [vmem:[%s515] sm:$0xff]
          %v609 = vpack.c.bf16 %v608, %v608
          %v610 = vld [vmem:[%s525] sm:$0xff]
          %v611 = vpack.c.bf16 %v610, %v610
          %v612 = vld [vmem:[#allocation13] sm:$0xf]
          %v613 = vld [vmem:[#allocation13 + $0x4] sm:$0xf]
          %v614 = vld [vmem:[#allocation13 + $0x8] sm:$0xf]
          %v615 = vld [vmem:[#allocation13 + $0xc] sm:$0xf]
          %v616 = vld [vmem:[%s7] sm:$0x1]
          %v618 = vperm.slane %v616, 0
          %v624 = vunpack.c.l.b16 %v612
          %v625 = vunpack.c.l.b16 %v613
          %v626 = vunpack.c.l.b16 %v614
          %v627 = vunpack.c.l.b16 %v615
          %v628 = vpack.c.b16 %v625, %v624
          %v629 = vpack.c.b16 %v627, %v626
          %vm632 = vcmask 261120
          %v634 = vsel %vm632, %v609, 0
          %636 = vmatpush.bf16.msra.mxu0 0
          %637 = vmatpush.bf16.msra.mxu0 0
          %638 = vmatpush.bf16.msra.mxu0 0
          %639 = vmatpush.bf16.msra.mxu0 0
          %640 = vmatpush.bf16.msra.mxu0 0
          %641 = vmatpush.bf16.msra.mxu0 0
          %642 = vmatpush.bf16.msra.mxu0 %v629
          %643 = vmatpush.bf16.msra.mxu0 %v628
          %644 = vmatmul.bf16.gmra.mxu0 %v634
          %v645 = vpop.f32.mrf.mxu0
          %v646 = vadd.f32 %v618, %v645
          %v647 = vpop.f32.mrf.mxu0
          %648 = vdwg.mxu0
          %v649 = vpack.c.bf16 %v646, %v646
          %vm650 = vcmask 257024
          %651 = vst.msk [vmem:[#allocation2] sm:$0xf] %vm650, %v649
          %v652 = vld [vmem:[#allocation14] sm:$0xf]
          %v653 = vld [vmem:[#allocation14 + $0x4] sm:$0xf]
          %v654 = vld [vmem:[#allocation14 + $0x8] sm:$0xf]
          %v655 = vld [vmem:[#allocation14 + $0xc] sm:$0xf]
          %v656 = vld [vmem:[%s9] sm:$0x1]
          %v658 = vperm.slane %v656, 0
          %v664 = vunpack.c.l.b16 %v652
          %v665 = vunpack.c.l.b16 %v653
          %v666 = vunpack.c.l.b16 %v654
          %v667 = vunpack.c.l.b16 %v655
          %v668 = vpack.c.b16 %v665, %v664
          %v669 = vpack.c.b16 %v667, %v666
          %v673 = vsel %vm632, %v611, 0
          %675 = vmatpush.bf16.msra.mxu0 0
          %676 = vmatpush.bf16.msra.mxu0 0
          %677 = vmatpush.bf16.msra.mxu0 0
          %678 = vmatpush.bf16.msra.mxu0 0
          %679 = vmatpush.bf16.msra.mxu0 0
          %680 = vmatpush.bf16.msra.mxu0 0
          %681 = vmatpush.bf16.msra.mxu0 %v669
          %682 = vmatpush.bf16.msra.mxu0 %v668
          %683 = vmatmul.bf16.gmra.mxu0 %v673
          %v684 = vpop.f32.mrf.mxu0
          %v685 = vadd.f32 %v658, %v684
          %v686 = vpop.f32.mrf.mxu0
          %687 = vdwg.mxu0
          %v688 = vpack.c.bf16 %v685, %v685
          %689 = vst.msk [vmem:[#allocation3] sm:$0xf] %vm650, %v688
        $region100: #{tpu_custom_call.1} parent=67 // pred_fallthru
          _
        %v690 = vld [vmem:[%s505] sm:$0xff]
        %v691 = vpack.c.bf16 %v690, %v690
        %v692 = vld [vmem:[#allocation11] sm:$0xf]
        %v693 = vld [vmem:[#allocation11 + $0x4] sm:$0xf]
        %v694 = vld [vmem:[#allocation11 + $0x8] sm:$0xf]
        %v695 = vld [vmem:[#allocation11 + $0xc] sm:$0xf]
        %v696 = vld [vmem:[%s5] sm:$0x1]
        %v698 = vperm.slane %v696, 0
        %v704 = vunpack.c.l.b16 %v692
        %v705 = vunpack.c.l.b16 %v693
        %v706 = vunpack.c.l.b16 %v694
        %v707 = vunpack.c.l.b16 %v695
        %v708 = vpack.c.b16 %v705, %v704
        %v709 = vpack.c.b16 %v707, %v706
        %vm712 = vcmask 261120
        %v714 = vsel %vm712, %v691, 0
        %716 = vmatpush.bf16.msra.mxu0 0
        %717 = vmatpush.bf16.msra.mxu0 0
        %718 = vmatpush.bf16.msra.mxu0 0
        %719 = vmatpush.bf16.msra.mxu0 0
        %720 = vmatpush.bf16.msra.mxu0 0
        %721 = vmatpush.bf16.msra.mxu0 0
        %722 = vmatpush.bf16.msra.mxu0 %v709
        %723 = vmatpush.bf16.msra.mxu0 %v708
        %724 = vmatmul.bf16.gmra.mxu0 %v714
        %v725 = vpop.f32.mrf.mxu0
        %v726 = vadd.f32 %v698, %v725
        %v727 = vpop.f32.mrf.mxu0
        %728 = vdwg.mxu0
        %v729 = vpack.c.bf16 %v726, %v726
        %v730 = vld [vmem:[%s602] sm:$0x1]
        %v731 = vld [vmem:[#allocation2] sm:$0xf]
        %v732 = vld [vmem:[#allocation3] sm:$0xf]
        %v734 = vperm.slane %v730, 0
        %vm736 = vcmask 64512
        %v738 = vsel %vm736, %v729, 0
        %v741 = vsel %vm736, %v731, 0
        %743 = vmatpush.bf16.xpose.msra.mxu0 0
        %744 = vmatpush.bf16.xpose.msra.mxu0 0
        %745 = vmatpush.bf16.xpose.msra.mxu0 0
        %746 = vmatpush.bf16.xpose.msra.mxu0 0
        %747 = vmatpush.bf16.xpose.msra.mxu0 0
        %748 = vmatpush.bf16.xpose.msra.mxu0 0
        %749 = vmatpush.bf16.xpose.msra.mxu0 0
        %750 = vmatpush.bf16.xpose.msra.mxu0 %v741
        %751 = vmatmul.bf16.gmra.mxu0 %v738
        %v752 = vpop.f32.mrf.mxu0
        %v753 = vadd.f32 %v734, %v752
        %v754 = vpop.f32.mrf.mxu0
        %755 = vdwg.mxu0
        %v756 = vsel %vm736, %v753, -inf
        %757 = vmax.xlane.f32.xlu0 %v756
        %v758 = vpop.xlane.xlu0 %757
        %v759 = vsub.f32 %v753, %v758
        %v760 = vmul.f32 %v759, 1.442695
        %v761 = vpow.pop %v760
        %v762 = vsel %vm736, %v761, 0.0
        %763 = vadd.xlane.f32.xlu0 %v762
        %v764 = vpop.xlane.xlu0 %763
        %v765 = vpack.c.bf16 %v761, %v761
        %v767 = vsel %vm736, %v765, 0
        %vm769 = vcmask 1043456
        %v771 = vsel %vm769, %v732, 0
        %773 = vmatpush.bf16.msra.mxu0 0
        %774 = vmatpush.bf16.msra.mxu0 0
        %775 = vmatpush.bf16.msra.mxu0 0
        %776 = vmatpush.bf16.msra.mxu0 0
        %777 = vmatpush.bf16.msra.mxu0 0
        %778 = vmatpush.bf16.msra.mxu0 0
        %779 = vmatpush.bf16.msra.mxu0 0
        %780 = vmatpush.bf16.msra.mxu0 %v771
        %781 = vmatmul.bf16.gmra.mxu0 %v767
        %v782 = vpop.f32.mrf.mxu0
        %v783 = vadd.f32 0.0, %v782
        %v784 = vpop.f32.mrf.mxu0
        %785 = vdwg.mxu0
        %v786 = vrcp.pop %v764
        %v787 = vmul.f32 %v783, %v786
        %v788 = vpack.c.bf16 %v787, %v787
        %vm789 = vcmask 60416
        %790 = vst.msk [vmem:[#allocation4] sm:$0xf] %vm789, %v788
        %v792 = vunpack.c.l.b16 %v729
        %v793 = vpack.c.b16 %v792, %v792
        %794 = vrot.lane.b32.xlu0 %v793, 120
        %v795 = vpop.permute.xlu0 %794
        %v797 = vunpack.c.l.b16 %v731
        %v798 = vpack.c.b16 %v797, %v797
        %799 = vrot.lane.b32.xlu0 %v798, 120
        %v800 = vpop.permute.xlu0 %799
        %v802 = vsel %vm736, %v795, 0
        %v805 = vsel %vm736, %v800, 0
        %807 = vmatpush.bf16.xpose.msra.mxu0 0
        %808 = vmatpush.bf16.xpose.msra.mxu0 0
        %809 = vmatpush.bf16.xpose.msra.mxu0 0
        %810 = vmatpush.bf16.xpose.msra.mxu0 0
        %811 = vmatpush.bf16.xpose.msra.mxu0 0
        %812 = vmatpush.bf16.xpose.msra.mxu0 0
        %813 = vmatpush.bf16.xpose.msra.mxu0 0
        %814 = vmatpush.bf16.xpose.msra.mxu0 %v805
        %815 = vmatmul.bf16.gmra.mxu0 %v802
        %v816 = vpop.f32.mrf.mxu0
        %v817 = vadd.f32 %v734, %v816
        %v818 = vpop.f32.mrf.mxu0
        %819 = vdwg.mxu0
        %v820 = vsel %vm736, %v817, -inf
        %821 = vmax.xlane.f32.xlu0 %v820
        %v822 = vpop.xlane.xlu0 %821
        %v823 = vsub.f32 %v817, %v822
        %v824 = vmul.f32 %v823, 1.442695
        %v825 = vpow.pop %v824
        %v826 = vsel %vm736, %v825, 0.0
        %827 = vadd.xlane.f32.xlu0 %v826
        %v828 = vpop.xlane.xlu0 %827
        %v829 = vpack.c.bf16 %v825, %v825
        %v831 = vunpack.c.l.b16 %v732
        %v832 = vpack.c.b16 %v831, %v831
        %833 = vrot.lane.b32.xlu0 %v832, 120
        %v834 = vpop.permute.xlu0 %833
        %v836 = vsel %vm736, %v829, 0
        %v839 = vsel %vm769, %v834, 0
        %841 = vmatpush.bf16.msra.mxu0 0
        %842 = vmatpush.bf16.msra.mxu0 0
        %843 = vmatpush.bf16.msra.mxu0 0
        %844 = vmatpush.bf16.msra.mxu0 0
        %845 = vmatpush.bf16.msra.mxu0 0
        %846 = vmatpush.bf16.msra.mxu0 0
        %847 = vmatpush.bf16.msra.mxu0 0
        %848 = vmatpush.bf16.msra.mxu0 %v839
        %849 = vmatmul.bf16.gmra.mxu0 %v836
        %v850 = vpop.f32.mrf.mxu0
        %v851 = vadd.f32 0.0, %v850
        %v852 = vpop.f32.mrf.mxu0
        %853 = vdwg.mxu0
        %v854 = vrcp.pop %v828
        %v855 = vmul.f32 %v851, %v854
        %v856 = vpack.c.bf16 %v855, %v855
        %858 = vrot.lane.b32.xlu0 %v856, 8
        %v859 = vpop.permute.xlu0 %858
        %vm861 = vcmask 126016
        %862 = vst.msk [vmem:[#allocation4] sm:$0xf] %vm861, %v859
        %863 = vrot.lane.b32.xlu0 %v793, 112
        %v864 = vpop.permute.xlu0 %863
        %865 = vrot.lane.b32.xlu0 %v798, 112
        %v866 = vpop.permute.xlu0 %865
        %v868 = vsel %vm736, %v864, 0
        %v871 = vsel %vm736, %v866, 0
        %873 = vmatpush.bf16.xpose.msra.mxu0 0
        %874 = vmatpush.bf16.xpose.msra.mxu0 0
        %875 = vmatpush.bf16.xpose.msra.mxu0 0
        %876 = vmatpush.bf16.xpose.msra.mxu0 0
        %877 = vmatpush.bf16.xpose.msra.mxu0 0
        %878 = vmatpush.bf16.xpose.msra.mxu0 0
        %879 = vmatpush.bf16.xpose.msra.mxu0 0
        %880 = vmatpush.bf16.xpose.msra.mxu0 %v871
        %881 = vmatmul.bf16.gmra.mxu0 %v868
        %v882 = vpop.f32.mrf.mxu0
        %v883 = vadd.f32 %v734, %v882
        %v884 = vpop.f32.mrf.mxu0
        %885 = vdwg.mxu0
        %v886 = vsel %vm736, %v883, -inf
        %887 = vmax.xlane.f32.xlu0 %v886
        %v888 = vpop.xlane.xlu0 %887
        %v889 = vsub.f32 %v883, %v888
        %v890 = vmul.f32 %v889, 1.442695
        %v891 = vpow.pop %v890
        %v892 = vsel %vm736, %v891, 0.0
        %893 = vadd.xlane.f32.xlu0 %v892
        %v894 = vpop.xlane.xlu0 %893
        %v895 = vpack.c.bf16 %v891, %v891
        %896 = vrot.lane.b32.xlu0 %v832, 112
        %v897 = vpop.permute.xlu0 %896
        %v899 = vsel %vm736, %v895, 0
        %v902 = vsel %vm769, %v897, 0
        %904 = vmatpush.bf16.msra.mxu0 0
        %905 = vmatpush.bf16.msra.mxu0 0
        %906 = vmatpush.bf16.msra.mxu0 0
        %907 = vmatpush.bf16.msra.mxu0 0
        %908 = vmatpush.bf16.msra.mxu0 0
        %909 = vmatpush.bf16.msra.mxu0 0
        %910 = vmatpush.bf16.msra.mxu0 0
        %911 = vmatpush.bf16.msra.mxu0 %v902
        %912 = vmatmul.bf16.gmra.mxu0 %v899
        %v913 = vpop.f32.mrf.mxu0
        %v914 = vadd.f32 0.0, %v913
        %v915 = vpop.f32.mrf.mxu0
        %916 = vdwg.mxu0
        %v917 = vrcp.pop %v894
        %v918 = vmul.f32 %v914, %v917
        %v919 = vpack.c.bf16 %v918, %v918
        %921 = vrot.lane.b32.xlu0 %v919, 16
        %v922 = vpop.permute.xlu0 %921
        %vm924 = vcmask 191616
        %925 = vst.msk [vmem:[#allocation4] sm:$0xf] %vm924, %v922
        %926 = vrot.lane.b32.xlu0 %v793, 104
        %v927 = vpop.permute.xlu0 %926
        %928 = vrot.lane.b32.xlu0 %v798, 104
        %v929 = vpop.permute.xlu0 %928
        %v931 = vsel %vm736, %v927, 0
        %v934 = vsel %vm736, %v929, 0
        %936 = vmatpush.bf16.xpose.msra.mxu0 0
        %937 = vmatpush.bf16.xpose.msra.mxu0 0
        %938 = vmatpush.bf16.xpose.msra.mxu0 0
        %939 = vmatpush.bf16.xpose.msra.mxu0 0
        %940 = vmatpush.bf16.xpose.msra.mxu0 0
        %941 = vmatpush.bf16.xpose.msra.mxu0 0
        %942 = vmatpush.bf16.xpose.msra.mxu0 0
        %943 = vmatpush.bf16.xpose.msra.mxu0 %v934
        %944 = vmatmul.bf16.gmra.mxu0 %v931
        %v945 = vpop.f32.mrf.mxu0
        %v946 = vadd.f32 %v734, %v945
        %v947 = vpop.f32.mrf.mxu0
        %948 = vdwg.mxu0
        %v949 = vsel %vm736, %v946, -inf
        %950 = vmax.xlane.f32.xlu0 %v949
        %v951 = vpop.xlane.xlu0 %950
        %v952 = vsub.f32 %v946, %v951
        %v953 = vmul.f32 %v952, 1.442695
        %v954 = vpow.pop %v953
        %v955 = vsel %vm736, %v954, 0.0
        %956 = vadd.xlane.f32.xlu0 %v955
        %v957 = vpop.xlane.xlu0 %956
        %v958 = vpack.c.bf16 %v954, %v954
        %959 = vrot.lane.b32.xlu0 %v832, 104
        %v960 = vpop.permute.xlu0 %959
        %v962 = vsel %vm736, %v958, 0
        %v965 = vsel %vm769, %v960, 0
        %967 = vmatpush.bf16.msra.mxu0 0
        %968 = vmatpush.bf16.msra.mxu0 0
        %969 = vmatpush.bf16.msra.mxu0 0
        %970 = vmatpush.bf16.msra.mxu0 0
        %971 = vmatpush.bf16.msra.mxu0 0
        %972 = vmatpush.bf16.msra.mxu0 0
        %973 = vmatpush.bf16.msra.mxu0 0
        %974 = vmatpush.bf16.msra.mxu0 %v965
        %975 = vmatmul.bf16.gmra.mxu0 %v962
        %v976 = vpop.f32.mrf.mxu0
        %v977 = vadd.f32 0.0, %v976
        %v978 = vpop.f32.mrf.mxu0
        %979 = vdwg.mxu0
        %v980 = vrcp.pop %v957
        %v981 = vmul.f32 %v977, %v980
        %v982 = vpack.c.bf16 %v981, %v981
        %984 = vrot.lane.b32.xlu0 %v982, 24
        %v985 = vpop.permute.xlu0 %984
        %vm987 = vcmask 257216
        %988 = vst.msk [vmem:[#allocation4] sm:$0xf] %vm987, %v985
        %v989 = vld [vmem:[#allocation4] sm:$0xf]
        %v990 = vld [vmem:[#allocation16] sm:$0xf]
        %v991 = vld [vmem:[#allocation16 + $0x4] sm:$0xf]
        %v992 = vld [vmem:[#allocation16 + $0x8] sm:$0xf]
        %v993 = vld [vmem:[#allocation16 + $0xc] sm:$0xf]
        %v994 = vld [vmem:[%s11] sm:$0x1]
        %v996 = vperm.slane %v994, 0
        %v1002 = vunpack.c.l.b16 %v990
        %v1003 = vunpack.c.l.b16 %v991
        %v1004 = vunpack.c.l.b16 %v992
        %v1005 = vunpack.c.l.b16 %v993
        %v1006 = vpack.c.b16 %v1003, %v1002
        %v1007 = vpack.c.b16 %v1005, %v1004
        %v1011 = vsel %vm712, %v989, 0
        %1013 = vmatpush.bf16.msra.mxu0 0
        %1014 = vmatpush.bf16.msra.mxu0 0
        %1015 = vmatpush.bf16.msra.mxu0 0
        %1016 = vmatpush.bf16.msra.mxu0 0
        %1017 = vmatpush.bf16.msra.mxu0 0
        %1018 = vmatpush.bf16.msra.mxu0 0
        %1019 = vmatpush.bf16.msra.mxu0 %v1007
        %1020 = vmatpush.bf16.msra.mxu0 %v1006
        %1021 = vmatmul.bf16.gmra.mxu0 %v1011
        %v1022 = vpop.f32.mrf.mxu0
        %v1023 = vadd.f32 %v996, %v1022
        %v1024 = vpop.f32.mrf.mxu0
        %1025 = vdwg.mxu0
        %1026 = vst.msk [vmem:[%s599] sm:$0xff] %vm712, %v1023
        %s1027 = sand.u32 %s330, 1
        %s1028 = scalar_lea.sflag [#allocation7], %s1027
        %s1029 = sand.u32 %s330, 1
        %s1030 = smul.addr %s1029, 8
        %s1031 = scalar_lea.vmem [#allocation17], %s1030
        // Predicated region
        $region101: #{tpu_custom_call.1} parent=67 // pred_check
          %p1032 = pneg %p340
        $region102: #{tpu_custom_call.1} parent=67 // pred_check_branch
          %1034 = sbr.rel (%p1032) target = $region104
        $region103: #{tpu_custom_call.1} parent=67 // pred_region
          %1036 = vsyncadd %s1028, 0
          %s1037 = sadd.s32 %s39, %s38
          %s1038 = smul.addr %s1037, 8
          %s1039 = scalar_lea.hbm %s12, %s1038
          %s1041 = sshll.u32 %s1031, 4
          %s1042 = int_to_ptr.vmem [resolvable:$true] %s1041
          %s1043 = sshll.u32 %s1039, 4
          %s1044 = int_to_ptr.hbm [resolvable:$true] %s1043
          %1046 = dma.vmem_to_hbm [thread:$0]  %s1042, 128, %s1044, %s1028
        $region104: #{tpu_custom_call.1} parent=67 // pred_fallthru
          _
      $region68: #{tpu_custom_call.1} parent=5 // pred_fallthru
        _
      %p1047 = scmp.le.s32.totalorder 2, %s29
      // Predicated region
      $region105: #{tpu_custom_call.1} parent=5 // pred_check
        %p1048 = pneg %p1047
      $region106: #{tpu_custom_call.1} parent=5 // pred_check_branch
        %1050 = sbr.rel (%p1048) target = $region108
      $region107: #{tpu_custom_call.1} parent=5 // pred_region
        %s1051 = ssub.s32 %s29, 2
        // Predicated region
        $region109: #{tpu_custom_call.1} parent=107 // pred_check
          %p1052 = pneg %p346
        $region110: #{tpu_custom_call.1} parent=107 // pred_check_branch
          %1054 = sbr.rel (%p1052) target = $region112
        $region111: #{tpu_custom_call.1} parent=107 // pred_region
          %s1055 = sand.u32 %s331, 1
          %s1056 = scalar_lea.sflag [#allocation7], %s1055
          %s1057 = sand.u32 %s331, 1
          %s1058 = smul.addr %s1057, 8
          %s1059 = scalar_lea.vmem [#allocation17], %s1058
          %1061 = dma.done %s1056, 128
        $region112: #{tpu_custom_call.1} parent=107 // pred_fallthru
          _
      $region108: #{tpu_custom_call.1} parent=5 // pred_fallthru
        _
    $region6: #{tpu_custom_call.1} parent=1 // loop_footer
      %s33 = sadd.s32 1, %s29
    $region7: #{tpu_custom_call.1} parent=1 // loop_footer_branch
      %28 = sbr.rel target = $region3
    $region8: #{tpu_custom_call.1} parent=1 // loop_exit
      _
    %1062 = vsyncpa [#allocation6], 1
    %s1063 = scalar_lea.sflag [#allocation6], 1
    %1064 = vsyncpa %s1063, 1
    %1065 = vsyncpa [#allocation9], 1
    %s1066 = scalar_lea.sflag [#allocation9], 1
    %1067 = vsyncpa %s1066, 1
    %1068 = vsyncpa [#allocation12], 1
    %1069 = vsyncpa [#allocation15], 1
    %1070 = vsyncpa [#allocation7], 1
    %s1071 = scalar_lea.sflag [#allocation7], 1
    %1072 = vsyncpa %s1071, 1

</llo_original>
